<compile_context>
chip_gen: v6e
topology: v6e:2x2x1
jax: 0.10.0
libtpu: 0.0.40
codegen_flags: <defaults>
</compile_context>

<pallas_src>
import jax
import jax.numpy as jnp
from jax.experimental import pallas as pl
from jax.experimental.pallas import tpu as pltpu


def _riffle_matrix(w_img, dtype):
    """(4W, 4W) 0/1 permutation R such that, for cat = [y00 | y01 | y10 | y11]
    (lane-concatenated per-(ki,kj) row slabs of width W), (cat @ R)[:, q] lays
    out q = ki*2W + 2j + kj, i.e. the two interleaved output rows of one input
    row, back to back."""
    m = jnp.arange(4 * w_img)
    ki = m // (2 * w_img)
    kj = (m % (2 * w_img)) // w_img
    j = m % w_img
    q = ki * (2 * w_img) + 2 * j + kj
    return jnp.zeros((4 * w_img, 4 * w_img), dtype).at[m, q].set(1)


def _pick_tile_rows(h, w, target_pixels):
    """Input rows per grid step.

    Prefer a divisor of H that is a multiple of 8 with TH*W a multiple of 128
    and <= target_pixels (legal, lane-dense, amortizes step overhead).
    Fallback TH = H is always legal because then every block dim equals the
    full array dim."""
    best = None
    for th in range(8, h + 1, 8):
        if h % th == 0 and th * w <= target_pixels and (th * w) % 128 == 0:
            best = th
    if best is None:
        best = h
    return best


def _upsample_kernel(x_ref, w_ref, b_ref, p_ref, o_ref):
    # x_ref: (1, C_in, P)        P = TH*W flattened input pixels (lane-dense)
    # w_ref: (4*C_out, C_in)     rows ordered (ki, kj, o)
    # b_ref: (4*C_out, 1)        bias, broadcast over lanes
    # p_ref: (4W, 4W)            riffle permutation (0/1)
    # o_ref: (1, C_out, TH, 4W)  output viewed as (N, C_out, H, 4W)
    c_out = w_ref.shape[0] // 4
    th = o_ref.shape[2]
    w_img = o_ref.shape[3] // 4

    x = x_ref[0]                                                   # (C_in, P)
    # Single lane-dense MXU matmul for the whole tile, f32 accumulation.
    y = jnp.dot(w_ref[...], x, preferred_element_type=jnp.float32)  # (4C_out, P)
    y = y + b_ref[...]                                             # bias (lane bcast)
    perm = p_ref[...]                                              # (4W, 4W)

    # Per input row: riffle the four (C_out, W) slabs into the two interleaved
    # output rows (one contiguous (C_out, 4W) store).  Static unroll.
    for il in range(th):
        yr = y[:, il * w_img:(il + 1) * w_img]                     # (4C_out, W)
        cat = jnp.concatenate(
            [yr[0 * c_out:1 * c_out, :],                           # (ki=0, kj=0)
             yr[1 * c_out:2 * c_out, :],                           # (ki=0, kj=1)
             yr[2 * c_out:3 * c_out, :],                           # (ki=1, kj=0)
             yr[3 * c_out:4 * c_out, :]],                          # (ki=1, kj=1)
            axis=-1)                                               # (C_out, 4W)
        row = jnp.dot(cat, perm, preferred_element_type=jnp.float32)
        o_ref[0, :, il, :] = row.astype(o_ref.dtype)


def upsample_conv_transpose_2x2(x, weight, bias, *, target_pixels=2048):
    """ConvTranspose2d(in_channels, out_channels, kernel_size=2, stride=2).

    x:      (N, C_in, H, W)        NCHW, as PyTorch
    weight: (C_in, C_out, 2, 2)    PyTorch ConvTranspose2d weight layout
    bias:   (C_out,)
    returns (N, C_out, 2H, 2W)
    """
    N, C_in, H, W = x.shape
    C_out = weight.shape[1]

    TH = _pick_tile_rows(H, W, target_pixels)
    P = TH * W

    # Free NCHW view: pixels on lanes, no transpose / no extra HBM pass.
    x3 = x.reshape(N, C_in, H * W)
    # (C_in, C_out, 2, 2) -> (ki, kj, o, c) -> (4*C_out, C_in); tiny tensors.
    w4 = jnp.transpose(weight, (2, 3, 1, 0)).reshape(4 * C_out, C_in)
    b4 = jnp.tile(bias, 4).reshape(4 * C_out, 1)
    p4 = _riffle_matrix(W, jnp.float32)

    out4 = pl.pallas_call(
        _upsample_kernel,
        out_shape=jax.ShapeDtypeStruct((N, C_out, H, 4 * W), x.dtype),
        grid=(N, H // TH),
        in_specs=[
            pl.BlockSpec((1, C_in, P), lambda n, t: (n, 0, t)),
            pl.BlockSpec((4 * C_out, C_in), lambda n, t: (0, 0)),
            pl.BlockSpec((4 * C_out, 1), lambda n, t: (0, 0)),
            pl.BlockSpec((4 * W, 4 * W), lambda n, t: (0, 0)),
        ],
        out_specs=pl.BlockSpec((1, C_out, TH, 4 * W), lambda n, t: (n, 0, t, 0)),
        compiler_params=pltpu.CompilerParams(
            dimension_semantics=("parallel", "parallel")),
    )(x3, w4, b4, p4)

    # (N, C_out, H, 4W) -> (N, C_out, 2H, 2W) is a pure (metadata) reshape:
    # row i of the 4W view is [output row 2i | output row 2i+1].
    return out4.reshape(N, C_out, 2 * H, 2 * W)


def _reference_conv_transpose_2x2(x, weight, bias):
    # out[n, o, 2i+ki, 2j+kj] = sum_c x[n,c,i,j] * w[c,o,ki,kj] + b[o]
    N, C_in, H, W = x.shape
    C_out = weight.shape[1]
    t = jnp.einsum('ncij,cokl->noikjl', x, weight)          # (N, C_out, H, 2, W, 2)
    out = t.reshape(N, C_out, 2 * H, 2 * W)
    return out + bias[None, :, None, None]


if __name__ == "__main__":
    key = jax.random.PRNGKey(0)
    kx, kw, kb = jax.random.split(key, 3)

    N, C_in, C_out, H, W = 2, 8, 4, 16, 16
    x = jax.random.normal(kx, (N, C_in, H, W), dtype=jnp.float32)

    # Deterministic parameter init (uniform, roughly matching PyTorch's scale).
    fan = C_in * 2 * 2
    bound = 1.0 / (fan ** 0.5)
    weight = jax.random.uniform(kw, (C_in, C_out, 2, 2), jnp.float32,
                                minval=-bound, maxval=bound)
    bias = jax.random.uniform(kb, (C_out,), jnp.float32,
                              minval=-bound, maxval=bound)

    out = upsample_conv_transpose_2x2(x, weight, bias)
    out = jax.block_until_ready(out)

    ref = _reference_conv_transpose_2x2(x, weight, bias)
    assert out.shape == (N, C_out, 2 * H, 2 * W)
    assert jnp.allclose(out, ref, atol=1e-5, rtol=1e-5), "mismatch vs reference"

    print("KERNEL_OK")
</pallas_src>

<mosaic_0001>
module attributes {stable_mosaic.version = 11 : i64} {
  func.func @_upsample_kernel(%arg0: i32, %arg1: i32, %arg2: memref<1x8x256xf32, #tpu.memory_space<vmem>>, %arg3: memref<16x8xf32, #tpu.memory_space<vmem>>, %arg4: memref<16x1xf32, #tpu.memory_space<vmem>>, %arg5: memref<64x64xf32, #tpu.memory_space<vmem>>, %arg6: memref<1x4x16x64xf32, #tpu.memory_space<vmem>>) attributes {dimension_semantics = [#tpu.dimension_semantics<parallel>, #tpu.dimension_semantics<parallel>], iteration_bounds = array<i64: 2, 1>, scalar_prefetch = 0 : i64, scratch_operands = 0 : i64, tpu.core_type = #tpu.core_type<tc>, window_params = [{transform_indices = @transform_0, window_bounds = array<i64: 1, 8, 256>}, {pipeline_mode = #tpu.pipeline_mode<synchronous>, transform_indices = @transform_1, window_bounds = array<i64: 16, 8>}, {pipeline_mode = #tpu.pipeline_mode<synchronous>, transform_indices = @transform_2, window_bounds = array<i64: 16, 1>}, {pipeline_mode = #tpu.pipeline_mode<synchronous>, transform_indices = @transform_3, window_bounds = array<i64: 64, 64>}, {transform_indices = @transform_4, window_bounds = array<i64: 1, 4, 16, 64>}]} {
    %c0 = arith.constant 0 : index
    %c0_0 = arith.constant 0 : index
    %c0_1 = arith.constant 0 : index
    %0 = vector.load %arg2[%c0, %c0_0, %c0_1] : memref<1x8x256xf32, #tpu.memory_space<vmem>>, vector<1x8x256xf32>
    %1 = vector.shape_cast %0 : vector<1x8x256xf32> to vector<8x256xf32>
    %c0_2 = arith.constant 0 : index
    %c0_3 = arith.constant 0 : index
    %2 = vector.load %arg3[%c0_2, %c0_3] : memref<16x8xf32, #tpu.memory_space<vmem>>, vector<16x8xf32>
    %cst = arith.constant dense<0.000000e+00> : vector<16x256xf32>
    %3 = tpu.matmul %2, %1, %cst {dimension_numbers = #tpu.dot_dimension_numbers<[1], [0], [0], [1], [0, 0, 1, 1], [], []>} : vector<16x8xf32>, vector<8x256xf32>, vector<16x256xf32> -> vector<16x256xf32>
    %c0_4 = arith.constant 0 : index
    %c0_5 = arith.constant 0 : index
    %4 = vector.load %arg4[%c0_4, %c0_5] : memref<16x1xf32, #tpu.memory_space<vmem>>, vector<16x1xf32>
    %5 = vector.broadcast %4 : vector<16x1xf32> to vector<16x256xf32>
    %6 = arith.addf %3, %5 : vector<16x256xf32>
    %c0_6 = arith.constant 0 : index
    %c0_7 = arith.constant 0 : index
    %7 = vector.load %arg5[%c0_6, %c0_7] : memref<64x64xf32, #tpu.memory_space<vmem>>, vector<64x64xf32>
    %8 = vector.extract_strided_slice %6 {offsets = [0, 0], sizes = [16, 16], strides = [1, 1]} : vector<16x256xf32> to vector<16x16xf32>
    %9 = vector.extract_strided_slice %8 {offsets = [0, 0], sizes = [4, 16], strides = [1, 1]} : vector<16x16xf32> to vector<4x16xf32>
    %10 = vector.extract_strided_slice %8 {offsets = [4, 0], sizes = [4, 16], strides = [1, 1]} : vector<16x16xf32> to vector<4x16xf32>
    %11 = vector.extract_strided_slice %8 {offsets = [8, 0], sizes = [4, 16], strides = [1, 1]} : vector<16x16xf32> to vector<4x16xf32>
    %12 = vector.extract_strided_slice %8 {offsets = [12, 0], sizes = [4, 16], strides = [1, 1]} : vector<16x16xf32> to vector<4x16xf32>
    %13 = tpu.concatenate %9, %10, %11, %12 in 1 : vector<4x16xf32>, vector<4x16xf32>, vector<4x16xf32>, vector<4x16xf32> -> vector<4x64xf32>
    %cst_8 = arith.constant dense<0.000000e+00> : vector<4x64xf32>
    %14 = tpu.matmul %13, %7, %cst_8 {dimension_numbers = #tpu.dot_dimension_numbers<[1], [0], [0], [1], [0, 0, 1, 1], [], []>} : vector<4x64xf32>, vector<64x64xf32>, vector<4x64xf32> -> vector<4x64xf32>
    %c0_9 = arith.constant 0 : index
    %c0_10 = arith.constant 0 : index
    %c0_11 = arith.constant 0 : index
    %c0_12 = arith.constant 0 : index
    %15 = vector.load %arg6[%c0_9, %c0_10, %c0_11, %c0_12] : memref<1x4x16x64xf32, #tpu.memory_space<vmem>>, vector<1x4x1x64xf32>
    %16 = vector.shape_cast %15 : vector<1x4x1x64xf32> to vector<4x64xf32>
    %17 = vector.shape_cast %14 : vector<4x64xf32> to vector<1x4x1x64xf32>
    tpu.vector_store %arg6[%c0_9, %c0_10, %c0_11, %c0_12], %17 {strides = array<i32>} : memref<1x4x16x64xf32, #tpu.memory_space<vmem>>, vector<1x4x1x64xf32>,
    %18 = vector.extract_strided_slice %6 {offsets = [0, 16], sizes = [16, 16], strides = [1, 1]} : vector<16x256xf32> to vector<16x16xf32>
    %19 = vector.extract_strided_slice %18 {offsets = [0, 0], sizes = [4, 16], strides = [1, 1]} : vector<16x16xf32> to vector<4x16xf32>
    %20 = vector.extract_strided_slice %18 {offsets = [4, 0], sizes = [4, 16], strides = [1, 1]} : vector<16x16xf32> to vector<4x16xf32>
    %21 = vector.extract_strided_slice %18 {offsets = [8, 0], sizes = [4, 16], strides = [1, 1]} : vector<16x16xf32> to vector<4x16xf32>
    %22 = vector.extract_strided_slice %18 {offsets = [12, 0], sizes = [4, 16], strides = [1, 1]} : vector<16x16xf32> to vector<4x16xf32>
    %23 = tpu.concatenate %19, %20, %21, %22 in 1 : vector<4x16xf32>, vector<4x16xf32>, vector<4x16xf32>, vector<4x16xf32> -> vector<4x64xf32>
    %cst_13 = arith.constant dense<0.000000e+00> : vector<4x64xf32>
    %24 = tpu.matmul %23, %7, %cst_13 {dimension_numbers = #tpu.dot_dimension_numbers<[1], [0], [0], [1], [0, 0, 1, 1], [], []>} : vector<4x64xf32>, vector<64x64xf32>, vector<4x64xf32> -> vector<4x64xf32>
    %c0_14 = arith.constant 0 : index
    %c0_15 = arith.constant 0 : index
    %c1 = arith.constant 1 : index
    %c0_16 = arith.constant 0 : index
    %25 = vector.load %arg6[%c0_14, %c0_15, %c1, %c0_16] : memref<1x4x16x64xf32, #tpu.memory_space<vmem>>, vector<1x4x1x64xf32>
    %26 = vector.shape_cast %25 : vector<1x4x1x64xf32> to vector<4x64xf32>
    %27 = vector.shape_cast %24 : vector<4x64xf32> to vector<1x4x1x64xf32>
    tpu.vector_store %arg6[%c0_14, %c0_15, %c1, %c0_16], %27 {strides = array<i32>} : memref<1x4x16x64xf32, #tpu.memory_space<vmem>>, vector<1x4x1x64xf32>,
    %28 = vector.extract_strided_slice %6 {offsets = [0, 32], sizes = [16, 16], strides = [1, 1]} : vector<16x256xf32> to vector<16x16xf32>
    %29 = vector.extract_strided_slice %28 {offsets = [0, 0], sizes = [4, 16], strides = [1, 1]} : vector<16x16xf32> to vector<4x16xf32>
    %30 = vector.extract_strided_slice %28 {offsets = [4, 0], sizes = [4, 16], strides = [1, 1]} : vector<16x16xf32> to vector<4x16xf32>
    %31 = vector.extract_strided_slice %28 {offsets = [8, 0], sizes = [4, 16], strides = [1, 1]} : vector<16x16xf32> to vector<4x16xf32>
    %32 = vector.extract_strided_slice %28 {offsets = [12, 0], sizes = [4, 16], strides = [1, 1]} : vector<16x16xf32> to vector<4x16xf32>
    %33 = tpu.concatenate %29, %30, %31, %32 in 1 : vector<4x16xf32>, vector<4x16xf32>, vector<4x16xf32>, vector<4x16xf32> -> vector<4x64xf32>
    %cst_17 = arith.constant dense<0.000000e+00> : vector<4x64xf32>
    %34 = tpu.matmul %33, %7, %cst_17 {dimension_numbers = #tpu.dot_dimension_numbers<[1], [0], [0], [1], [0, 0, 1, 1], [], []>} : vector<4x64xf32>, vector<64x64xf32>, vector<4x64xf32> -> vector<4x64xf32>
    %c0_18 = arith.constant 0 : index
    %c0_19 = arith.constant 0 : index
    %c2 = arith.constant 2 : index
    %c0_20 = arith.constant 0 : index
    %35 = vector.load %arg6[%c0_18, %c0_19, %c2, %c0_20] : memref<1x4x16x64xf32, #tpu.memory_space<vmem>>, vector<1x4x1x64xf32>
    %36 = vector.shape_cast %35 : vector<1x4x1x64xf32> to vector<4x64xf32>
    %37 = vector.shape_cast %34 : vector<4x64xf32> to vector<1x4x1x64xf32>
    tpu.vector_store %arg6[%c0_18, %c0_19, %c2, %c0_20], %37 {strides = array<i32>} : memref<1x4x16x64xf32, #tpu.memory_space<vmem>>, vector<1x4x1x64xf32>,
    %38 = vector.extract_strided_slice %6 {offsets = [0, 48], sizes = [16, 16], strides = [1, 1]} : vector<16x256xf32> to vector<16x16xf32>
    %39 = vector.extract_strided_slice %38 {offsets = [0, 0], sizes = [4, 16], strides = [1, 1]} : vector<16x16xf32> to vector<4x16xf32>
    %40 = vector.extract_strided_slice %38 {offsets = [4, 0], sizes = [4, 16], strides = [1, 1]} : vector<16x16xf32> to vector<4x16xf32>
    %41 = vector.extract_strided_slice %38 {offsets = [8, 0], sizes = [4, 16], strides = [1, 1]} : vector<16x16xf32> to vector<4x16xf32>
    %42 = vector.extract_strided_slice %38 {offsets = [12, 0], sizes = [4, 16], strides = [1, 1]} : vector<16x16xf32> to vector<4x16xf32>
    %43 = tpu.concatenate %39, %40, %41, %42 in 1 : vector<4x16xf32>, vector<4x16xf32>, vector<4x16xf32>, vector<4x16xf32> -> vector<4x64xf32>
    %cst_21 = arith.constant dense<0.000000e+00> : vector<4x64xf32>
    %44 = tpu.matmul %43, %7, %cst_21 {dimension_numbers = #tpu.dot_dimension_numbers<[1], [0], [0], [1], [0, 0, 1, 1], [], []>} : vector<4x64xf32>, vector<64x64xf32>, vector<4x64xf32> -> vector<4x64xf32>
    %c0_22 = arith.constant 0 : index
    %c0_23 = arith.constant 0 : index
    %c3 = arith.constant 3 : index
    %c0_24 = arith.constant 0 : index
    %45 = vector.load %arg6[%c0_22, %c0_23, %c3, %c0_24] : memref<1x4x16x64xf32, #tpu.memory_space<vmem>>, vector<1x4x1x64xf32>
    %46 = vector.shape_cast %45 : vector<1x4x1x64xf32> to vector<4x64xf32>
    %47 = vector.shape_cast %44 : vector<4x64xf32> to vector<1x4x1x64xf32>
    tpu.vector_store %arg6[%c0_22, %c0_23, %c3, %c0_24], %47 {strides = array<i32>} : memref<1x4x16x64xf32, #tpu.memory_space<vmem>>, vector<1x4x1x64xf32>,
    %48 = vector.extract_strided_slice %6 {offsets = [0, 64], sizes = [16, 16], strides = [1, 1]} : vector<16x256xf32> to vector<16x16xf32>
    %49 = vector.extract_strided_slice %48 {offsets = [0, 0], sizes = [4, 16], strides = [1, 1]} : vector<16x16xf32> to vector<4x16xf32>
    %50 = vector.extract_strided_slice %48 {offsets = [4, 0], sizes = [4, 16], strides = [1, 1]} : vector<16x16xf32> to vector<4x16xf32>
    %51 = vector.extract_strided_slice %48 {offsets = [8, 0], sizes = [4, 16], strides = [1, 1]} : vector<16x16xf32> to vector<4x16xf32>
    %52 = vector.extract_strided_slice %48 {offsets = [12, 0], sizes = [4, 16], strides = [1, 1]} : vector<16x16xf32> to vector<4x16xf32>
    %53 = tpu.concatenate %49, %50, %51, %52 in 1 : vector<4x16xf32>, vector<4x16xf32>, vector<4x16xf32>, vector<4x16xf32> -> vector<4x64xf32>
    %cst_25 = arith.constant dense<0.000000e+00> : vector<4x64xf32>
    %54 = tpu.matmul %53, %7, %cst_25 {dimension_numbers = #tpu.dot_dimension_numbers<[1], [0], [0], [1], [0, 0, 1, 1], [], []>} : vector<4x64xf32>, vector<64x64xf32>, vector<4x64xf32> -> vector<4x64xf32>
    %c0_26 = arith.constant 0 : index
    %c0_27 = arith.constant 0 : index
    %c4 = arith.constant 4 : index
    %c0_28 = arith.constant 0 : index
    %55 = vector.load %arg6[%c0_26, %c0_27, %c4, %c0_28] : memref<1x4x16x64xf32, #tpu.memory_space<vmem>>, vector<1x4x1x64xf32>
    %56 = vector.shape_cast %55 : vector<1x4x1x64xf32> to vector<4x64xf32>
    %57 = vector.shape_cast %54 : vector<4x64xf32> to vector<1x4x1x64xf32>
    tpu.vector_store %arg6[%c0_26, %c0_27, %c4, %c0_28], %57 {strides = array<i32>} : memref<1x4x16x64xf32, #tpu.memory_space<vmem>>, vector<1x4x1x64xf32>,
    %58 = vector.extract_strided_slice %6 {offsets = [0, 80], sizes = [16, 16], strides = [1, 1]} : vector<16x256xf32> to vector<16x16xf32>
    %59 = vector.extract_strided_slice %58 {offsets = [0, 0], sizes = [4, 16], strides = [1, 1]} : vector<16x16xf32> to vector<4x16xf32>
    %60 = vector.extract_strided_slice %58 {offsets = [4, 0], sizes = [4, 16], strides = [1, 1]} : vector<16x16xf32> to vector<4x16xf32>
    %61 = vector.extract_strided_slice %58 {offsets = [8, 0], sizes = [4, 16], strides = [1, 1]} : vector<16x16xf32> to vector<4x16xf32>
    %62 = vector.extract_strided_slice %58 {offsets = [12, 0], sizes = [4, 16], strides = [1, 1]} : vector<16x16xf32> to vector<4x16xf32>
    %63 = tpu.concatenate %59, %60, %61, %62 in 1 : vector<4x16xf32>, vector<4x16xf32>, vector<4x16xf32>, vector<4x16xf32> -> vector<4x64xf32>
    %cst_29 = arith.constant dense<0.000000e+00> : vector<4x64xf32>
    %64 = tpu.matmul %63, %7, %cst_29 {dimension_numbers = #tpu.dot_dimension_numbers<[1], [0], [0], [1], [0, 0, 1, 1], [], []>} : vector<4x64xf32>, vector<64x64xf32>, vector<4x64xf32> -> vector<4x64xf32>
    %c0_30 = arith.constant 0 : index
    %c0_31 = arith.constant 0 : index
    %c5 = arith.constant 5 : index
    %c0_32 = arith.constant 0 : index
    %65 = vector.load %arg6[%c0_30, %c0_31, %c5, %c0_32] : memref<1x4x16x64xf32, #tpu.memory_space<vmem>>, vector<1x4x1x64xf32>
    %66 = vector.shape_cast %65 : vector<1x4x1x64xf32> to vector<4x64xf32>
    %67 = vector.shape_cast %64 : vector<4x64xf32> to vector<1x4x1x64xf32>
    tpu.vector_store %arg6[%c0_30, %c0_31, %c5, %c0_32], %67 {strides = array<i32>} : memref<1x4x16x64xf32, #tpu.memory_space<vmem>>, vector<1x4x1x64xf32>,
    %68 = vector.extract_strided_slice %6 {offsets = [0, 96], sizes = [16, 16], strides = [1, 1]} : vector<16x256xf32> to vector<16x16xf32>
    %69 = vector.extract_strided_slice %68 {offsets = [0, 0], sizes = [4, 16], strides = [1, 1]} : vector<16x16xf32> to vector<4x16xf32>
    %70 = vector.extract_strided_slice %68 {offsets = [4, 0], sizes = [4, 16], strides = [1, 1]} : vector<16x16xf32> to vector<4x16xf32>
    %71 = vector.extract_strided_slice %68 {offsets = [8, 0], sizes = [4, 16], strides = [1, 1]} : vector<16x16xf32> to vector<4x16xf32>
    %72 = vector.extract_strided_slice %68 {offsets = [12, 0], sizes = [4, 16], strides = [1, 1]} : vector<16x16xf32> to vector<4x16xf32>
    %73 = tpu.concatenate %69, %70, %71, %72 in 1 : vector<4x16xf32>, vector<4x16xf32>, vector<4x16xf32>, vector<4x16xf32> -> vector<4x64xf32>
    %cst_33 = arith.constant dense<0.000000e+00> : vector<4x64xf32>
    %74 = tpu.matmul %73, %7, %cst_33 {dimension_numbers = #tpu.dot_dimension_numbers<[1], [0], [0], [1], [0, 0, 1, 1], [], []>} : vector<4x64xf32>, vector<64x64xf32>, vector<4x64xf32> -> vector<4x64xf32>
    %c0_34 = arith.constant 0 : index
    %c0_35 = arith.constant 0 : index
    %c6 = arith.constant 6 : index
    %c0_36 = arith.constant 0 : index
    %75 = vector.load %arg6[%c0_34, %c0_35, %c6, %c0_36] : memref<1x4x16x64xf32, #tpu.memory_space<vmem>>, vector<1x4x1x64xf32>
    %76 = vector.shape_cast %75 : vector<1x4x1x64xf32> to vector<4x64xf32>
    %77 = vector.shape_cast %74 : vector<4x64xf32> to vector<1x4x1x64xf32>
    tpu.vector_store %arg6[%c0_34, %c0_35, %c6, %c0_36], %77 {strides = array<i32>} : memref<1x4x16x64xf32, #tpu.memory_space<vmem>>, vector<1x4x1x64xf32>,
    %78 = vector.extract_strided_slice %6 {offsets = [0, 112], sizes = [16, 16], strides = [1, 1]} : vector<16x256xf32> to vector<16x16xf32>
    %79 = vector.extract_strided_slice %78 {offsets = [0, 0], sizes = [4, 16], strides = [1, 1]} : vector<16x16xf32> to vector<4x16xf32>
    %80 = vector.extract_strided_slice %78 {offsets = [4, 0], sizes = [4, 16], strides = [1, 1]} : vector<16x16xf32> to vector<4x16xf32>
    %81 = vector.extract_strided_slice %78 {offsets = [8, 0], sizes = [4, 16], strides = [1, 1]} : vector<16x16xf32> to vector<4x16xf32>
    %82 = vector.extract_strided_slice %78 {offsets = [12, 0], sizes = [4, 16], strides = [1, 1]} : vector<16x16xf32> to vector<4x16xf32>
    %83 = tpu.concatenate %79, %80, %81, %82 in 1 : vector<4x16xf32>, vector<4x16xf32>, vector<4x16xf32>, vector<4x16xf32> -> vector<4x64xf32>
    %cst_37 = arith.constant dense<0.000000e+00> : vector<4x64xf32>
    %84 = tpu.matmul %83, %7, %cst_37 {dimension_numbers = #tpu.dot_dimension_numbers<[1], [0], [0], [1], [0, 0, 1, 1], [], []>} : vector<4x64xf32>, vector<64x64xf32>, vector<4x64xf32> -> vector<4x64xf32>
    %c0_38 = arith.constant 0 : index
    %c0_39 = arith.constant 0 : index
    %c7 = arith.constant 7 : index
    %c0_40 = arith.constant 0 : index
    %85 = vector.load %arg6[%c0_38, %c0_39, %c7, %c0_40] : memref<1x4x16x64xf32, #tpu.memory_space<vmem>>, vector<1x4x1x64xf32>
    %86 = vector.shape_cast %85 : vector<1x4x1x64xf32> to vector<4x64xf32>
    %87 = vector.shape_cast %84 : vector<4x64xf32> to vector<1x4x1x64xf32>
    tpu.vector_store %arg6[%c0_38, %c0_39, %c7, %c0_40], %87 {strides = array<i32>} : memref<1x4x16x64xf32, #tpu.memory_space<vmem>>, vector<1x4x1x64xf32>,
    %88 = vector.extract_strided_slice %6 {offsets = [0, 128], sizes = [16, 16], strides = [1, 1]} : vector<16x256xf32> to vector<16x16xf32>
    %89 = vector.extract_strided_slice %88 {offsets = [0, 0], sizes = [4, 16], strides = [1, 1]} : vector<16x16xf32> to vector<4x16xf32>
    %90 = vector.extract_strided_slice %88 {offsets = [4, 0], sizes = [4, 16], strides = [1, 1]} : vector<16x16xf32> to vector<4x16xf32>
    %91 = vector.extract_strided_slice %88 {offsets = [8, 0], sizes = [4, 16], strides = [1, 1]} : vector<16x16xf32> to vector<4x16xf32>
    %92 = vector.extract_strided_slice %88 {offsets = [12, 0], sizes = [4, 16], strides = [1, 1]} : vector<16x16xf32> to vector<4x16xf32>
    %93 = tpu.concatenate %89, %90, %91, %92 in 1 : vector<4x16xf32>, vector<4x16xf32>, vector<4x16xf32>, vector<4x16xf32> -> vector<4x64xf32>
    %cst_41 = arith.constant dense<0.000000e+00> : vector<4x64xf32>
    %94 = tpu.matmul %93, %7, %cst_41 {dimension_numbers = #tpu.dot_dimension_numbers<[1], [0], [0], [1], [0, 0, 1, 1], [], []>} : vector<4x64xf32>, vector<64x64xf32>, vector<4x64xf32> -> vector<4x64xf32>
    %c0_42 = arith.constant 0 : index
    %c0_43 = arith.constant 0 : index
    %c8 = arith.constant 8 : index
    %c0_44 = arith.constant 0 : index
    %95 = vector.load %arg6[%c0_42, %c0_43, %c8, %c0_44] : memref<1x4x16x64xf32, #tpu.memory_space<vmem>>, vector<1x4x1x64xf32>
    %96 = vector.shape_cast %95 : vector<1x4x1x64xf32> to vector<4x64xf32>
    %97 = vector.shape_cast %94 : vector<4x64xf32> to vector<1x4x1x64xf32>
    tpu.vector_store %arg6[%c0_42, %c0_43, %c8, %c0_44], %97 {strides = array<i32>} : memref<1x4x16x64xf32, #tpu.memory_space<vmem>>, vector<1x4x1x64xf32>,
    %98 = vector.extract_strided_slice %6 {offsets = [0, 144], sizes = [16, 16], strides = [1, 1]} : vector<16x256xf32> to vector<16x16xf32>
    %99 = vector.extract_strided_slice %98 {offsets = [0, 0], sizes = [4, 16], strides = [1, 1]} : vector<16x16xf32> to vector<4x16xf32>
    %100 = vector.extract_strided_slice %98 {offsets = [4, 0], sizes = [4, 16], strides = [1, 1]} : vector<16x16xf32> to vector<4x16xf32>
    %101 = vector.extract_strided_slice %98 {offsets = [8, 0], sizes = [4, 16], strides = [1, 1]} : vector<16x16xf32> to vector<4x16xf32>
    %102 = vector.extract_strided_slice %98 {offsets = [12, 0], sizes = [4, 16], strides = [1, 1]} : vector<16x16xf32> to vector<4x16xf32>
    %103 = tpu.concatenate %99, %100, %101, %102 in 1 : vector<4x16xf32>, vector<4x16xf32>, vector<4x16xf32>, vector<4x16xf32> -> vector<4x64xf32>
    %cst_45 = arith.constant dense<0.000000e+00> : vector<4x64xf32>
    %104 = tpu.matmul %103, %7, %cst_45 {dimension_numbers = #tpu.dot_dimension_numbers<[1], [0], [0], [1], [0, 0, 1, 1], [], []>} : vector<4x64xf32>, vector<64x64xf32>, vector<4x64xf32> -> vector<4x64xf32>
    %c0_46 = arith.constant 0 : index
    %c0_47 = arith.constant 0 : index
    %c9 = arith.constant 9 : index
    %c0_48 = arith.constant 0 : index
    %105 = vector.load %arg6[%c0_46, %c0_47, %c9, %c0_48] : memref<1x4x16x64xf32, #tpu.memory_space<vmem>>, vector<1x4x1x64xf32>
    %106 = vector.shape_cast %105 : vector<1x4x1x64xf32> to vector<4x64xf32>
    %107 = vector.shape_cast %104 : vector<4x64xf32> to vector<1x4x1x64xf32>
    tpu.vector_store %arg6[%c0_46, %c0_47, %c9, %c0_48], %107 {strides = array<i32>} : memref<1x4x16x64xf32, #tpu.memory_space<vmem>>, vector<1x4x1x64xf32>,
    %108 = vector.extract_strided_slice %6 {offsets = [0, 160], sizes = [16, 16], strides = [1, 1]} : vector<16x256xf32> to vector<16x16xf32>
    %109 = vector.extract_strided_slice %108 {offsets = [0, 0], sizes = [4, 16], strides = [1, 1]} : vector<16x16xf32> to vector<4x16xf32>
    %110 = vector.extract_strided_slice %108 {offsets = [4, 0], sizes = [4, 16], strides = [1, 1]} : vector<16x16xf32> to vector<4x16xf32>
    %111 = vector.extract_strided_slice %108 {offsets = [8, 0], sizes = [4, 16], strides = [1, 1]} : vector<16x16xf32> to vector<4x16xf32>
    %112 = vector.extract_strided_slice %108 {offsets = [12, 0], sizes = [4, 16], strides = [1, 1]} : vector<16x16xf32> to vector<4x16xf32>
    %113 = tpu.concatenate %109, %110, %111, %112 in 1 : vector<4x16xf32>, vector<4x16xf32>, vector<4x16xf32>, vector<4x16xf32> -> vector<4x64xf32>
    %cst_49 = arith.constant dense<0.000000e+00> : vector<4x64xf32>
    %114 = tpu.matmul %113, %7, %cst_49 {dimension_numbers = #tpu.dot_dimension_numbers<[1], [0], [0], [1], [0, 0, 1, 1], [], []>} : vector<4x64xf32>, vector<64x64xf32>, vector<4x64xf32> -> vector<4x64xf32>
    %c0_50 = arith.constant 0 : index
    %c0_51 = arith.constant 0 : index
    %c10 = arith.constant 10 : index
    %c0_52 = arith.constant 0 : index
    %115 = vector.load %arg6[%c0_50, %c0_51, %c10, %c0_52] : memref<1x4x16x64xf32, #tpu.memory_space<vmem>>, vector<1x4x1x64xf32>
    %116 = vector.shape_cast %115 : vector<1x4x1x64xf32> to vector<4x64xf32>
    %117 = vector.shape_cast %114 : vector<4x64xf32> to vector<1x4x1x64xf32>
    tpu.vector_store %arg6[%c0_50, %c0_51, %c10, %c0_52], %117 {strides = array<i32>} : memref<1x4x16x64xf32, #tpu.memory_space<vmem>>, vector<1x4x1x64xf32>,
    %118 = vector.extract_strided_slice %6 {offsets = [0, 176], sizes = [16, 16], strides = [1, 1]} : vector<16x256xf32> to vector<16x16xf32>
    %119 = vector.extract_strided_slice %118 {offsets = [0, 0], sizes = [4, 16], strides = [1, 1]} : vector<16x16xf32> to vector<4x16xf32>
    %120 = vector.extract_strided_slice %118 {offsets = [4, 0], sizes = [4, 16], strides = [1, 1]} : vector<16x16xf32> to vector<4x16xf32>
    %121 = vector.extract_strided_slice %118 {offsets = [8, 0], sizes = [4, 16], strides = [1, 1]} : vector<16x16xf32> to vector<4x16xf32>
    %122 = vector.extract_strided_slice %118 {offsets = [12, 0], sizes = [4, 16], strides = [1, 1]} : vector<16x16xf32> to vector<4x16xf32>
    %123 = tpu.concatenate %119, %120, %121, %122 in 1 : vector<4x16xf32>, vector<4x16xf32>, vector<4x16xf32>, vector<4x16xf32> -> vector<4x64xf32>
    %cst_53 = arith.constant dense<0.000000e+00> : vector<4x64xf32>
    %124 = tpu.matmul %123, %7, %cst_53 {dimension_numbers = #tpu.dot_dimension_numbers<[1], [0], [0], [1], [0, 0, 1, 1], [], []>} : vector<4x64xf32>, vector<64x64xf32>, vector<4x64xf32> -> vector<4x64xf32>
    %c0_54 = arith.constant 0 : index
    %c0_55 = arith.constant 0 : index
    %c11 = arith.constant 11 : index
    %c0_56 = arith.constant 0 : index
    %125 = vector.load %arg6[%c0_54, %c0_55, %c11, %c0_56] : memref<1x4x16x64xf32, #tpu.memory_space<vmem>>, vector<1x4x1x64xf32>
    %126 = vector.shape_cast %125 : vector<1x4x1x64xf32> to vector<4x64xf32>
    %127 = vector.shape_cast %124 : vector<4x64xf32> to vector<1x4x1x64xf32>
    tpu.vector_store %arg6[%c0_54, %c0_55, %c11, %c0_56], %127 {strides = array<i32>} : memref<1x4x16x64xf32, #tpu.memory_space<vmem>>, vector<1x4x1x64xf32>,
    %128 = vector.extract_strided_slice %6 {offsets = [0, 192], sizes = [16, 16], strides = [1, 1]} : vector<16x256xf32> to vector<16x16xf32>
    %129 = vector.extract_strided_slice %128 {offsets = [0, 0], sizes = [4, 16], strides = [1, 1]} : vector<16x16xf32> to vector<4x16xf32>
    %130 = vector.extract_strided_slice %128 {offsets = [4, 0], sizes = [4, 16], strides = [1, 1]} : vector<16x16xf32> to vector<4x16xf32>
    %131 = vector.extract_strided_slice %128 {offsets = [8, 0], sizes = [4, 16], strides = [1, 1]} : vector<16x16xf32> to vector<4x16xf32>
    %132 = vector.extract_strided_slice %128 {offsets = [12, 0], sizes = [4, 16], strides = [1, 1]} : vector<16x16xf32> to vector<4x16xf32>
    %133 = tpu.concatenate %129, %130, %131, %132 in 1 : vector<4x16xf32>, vector<4x16xf32>, vector<4x16xf32>, vector<4x16xf32> -> vector<4x64xf32>
    %cst_57 = arith.constant dense<0.000000e+00> : vector<4x64xf32>
    %134 = tpu.matmul %133, %7, %cst_57 {dimension_numbers = #tpu.dot_dimension_numbers<[1], [0], [0], [1], [0, 0, 1, 1], [], []>} : vector<4x64xf32>, vector<64x64xf32>, vector<4x64xf32> -> vector<4x64xf32>
    %c0_58 = arith.constant 0 : index
    %c0_59 = arith.constant 0 : index
    %c12 = arith.constant 12 : index
    %c0_60 = arith.constant 0 : index
    %135 = vector.load %arg6[%c0_58, %c0_59, %c12, %c0_60] : memref<1x4x16x64xf32, #tpu.memory_space<vmem>>, vector<1x4x1x64xf32>
    %136 = vector.shape_cast %135 : vector<1x4x1x64xf32> to vector<4x64xf32>
    %137 = vector.shape_cast %134 : vector<4x64xf32> to vector<1x4x1x64xf32>
    tpu.vector_store %arg6[%c0_58, %c0_59, %c12, %c0_60], %137 {strides = array<i32>} : memref<1x4x16x64xf32, #tpu.memory_space<vmem>>, vector<1x4x1x64xf32>,
    %138 = vector.extract_strided_slice %6 {offsets = [0, 208], sizes = [16, 16], strides = [1, 1]} : vector<16x256xf32> to vector<16x16xf32>
    %139 = vector.extract_strided_slice %138 {offsets = [0, 0], sizes = [4, 16], strides = [1, 1]} : vector<16x16xf32> to vector<4x16xf32>
    %140 = vector.extract_strided_slice %138 {offsets = [4, 0], sizes = [4, 16], strides = [1, 1]} : vector<16x16xf32> to vector<4x16xf32>
    %141 = vector.extract_strided_slice %138 {offsets = [8, 0], sizes = [4, 16], strides = [1, 1]} : vector<16x16xf32> to vector<4x16xf32>
    %142 = vector.extract_strided_slice %138 {offsets = [12, 0], sizes = [4, 16], strides = [1, 1]} : vector<16x16xf32> to vector<4x16xf32>
    %143 = tpu.concatenate %139, %140, %141, %142 in 1 : vector<4x16xf32>, vector<4x16xf32>, vector<4x16xf32>, vector<4x16xf32> -> vector<4x64xf32>
    %cst_61 = arith.constant dense<0.000000e+00> : vector<4x64xf32>
    %144 = tpu.matmul %143, %7, %cst_61 {dimension_numbers = #tpu.dot_dimension_numbers<[1], [0], [0], [1], [0, 0, 1, 1], [], []>} : vector<4x64xf32>, vector<64x64xf32>, vector<4x64xf32> -> vector<4x64xf32>
    %c0_62 = arith.constant 0 : index
    %c0_63 = arith.constant 0 : index
    %c13 = arith.constant 13 : index
    %c0_64 = arith.constant 0 : index
    %145 = vector.load %arg6[%c0_62, %c0_63, %c13, %c0_64] : memref<1x4x16x64xf32, #tpu.memory_space<vmem>>, vector<1x4x1x64xf32>
    %146 = vector.shape_cast %145 : vector<1x4x1x64xf32> to vector<4x64xf32>
    %147 = vector.shape_cast %144 : vector<4x64xf32> to vector<1x4x1x64xf32>
    tpu.vector_store %arg6[%c0_62, %c0_63, %c13, %c0_64], %147 {strides = array<i32>} : memref<1x4x16x64xf32, #tpu.memory_space<vmem>>, vector<1x4x1x64xf32>,
    %148 = vector.extract_strided_slice %6 {offsets = [0, 224], sizes = [16, 16], strides = [1, 1]} : vector<16x256xf32> to vector<16x16xf32>
    %149 = vector.extract_strided_slice %148 {offsets = [0, 0], sizes = [4, 16], strides = [1, 1]} : vector<16x16xf32> to vector<4x16xf32>
    %150 = vector.extract_strided_slice %148 {offsets = [4, 0], sizes = [4, 16], strides = [1, 1]} : vector<16x16xf32> to vector<4x16xf32>
    %151 = vector.extract_strided_slice %148 {offsets = [8, 0], sizes = [4, 16], strides = [1, 1]} : vector<16x16xf32> to vector<4x16xf32>
    %152 = vector.extract_strided_slice %148 {offsets = [12, 0], sizes = [4, 16], strides = [1, 1]} : vector<16x16xf32> to vector<4x16xf32>
    %153 = tpu.concatenate %149, %150, %151, %152 in 1 : vector<4x16xf32>, vector<4x16xf32>, vector<4x16xf32>, vector<4x16xf32> -> vector<4x64xf32>
    %cst_65 = arith.constant dense<0.000000e+00> : vector<4x64xf32>
    %154 = tpu.matmul %153, %7, %cst_65 {dimension_numbers = #tpu.dot_dimension_numbers<[1], [0], [0], [1], [0, 0, 1, 1], [], []>} : vector<4x64xf32>, vector<64x64xf32>, vector<4x64xf32> -> vector<4x64xf32>
    %c0_66 = arith.constant 0 : index
    %c0_67 = arith.constant 0 : index
    %c14 = arith.constant 14 : index
    %c0_68 = arith.constant 0 : index
    %155 = vector.load %arg6[%c0_66, %c0_67, %c14, %c0_68] : memref<1x4x16x64xf32, #tpu.memory_space<vmem>>, vector<1x4x1x64xf32>
    %156 = vector.shape_cast %155 : vector<1x4x1x64xf32> to vector<4x64xf32>
    %157 = vector.shape_cast %154 : vector<4x64xf32> to vector<1x4x1x64xf32>
    tpu.vector_store %arg6[%c0_66, %c0_67, %c14, %c0_68], %157 {strides = array<i32>} : memref<1x4x16x64xf32, #tpu.memory_space<vmem>>, vector<1x4x1x64xf32>,
    %158 = vector.extract_strided_slice %6 {offsets = [0, 240], sizes = [16, 16], strides = [1, 1]} : vector<16x256xf32> to vector<16x16xf32>
    %159 = vector.extract_strided_slice %158 {offsets = [0, 0], sizes = [4, 16], strides = [1, 1]} : vector<16x16xf32> to vector<4x16xf32>
    %160 = vector.extract_strided_slice %158 {offsets = [4, 0], sizes = [4, 16], strides = [1, 1]} : vector<16x16xf32> to vector<4x16xf32>
    %161 = vector.extract_strided_slice %158 {offsets = [8, 0], sizes = [4, 16], strides = [1, 1]} : vector<16x16xf32> to vector<4x16xf32>
    %162 = vector.extract_strided_slice %158 {offsets = [12, 0], sizes = [4, 16], strides = [1, 1]} : vector<16x16xf32> to vector<4x16xf32>
    %163 = tpu.concatenate %159, %160, %161, %162 in 1 : vector<4x16xf32>, vector<4x16xf32>, vector<4x16xf32>, vector<4x16xf32> -> vector<4x64xf32>
    %cst_69 = arith.constant dense<0.000000e+00> : vector<4x64xf32>
    %164 = tpu.matmul %163, %7, %cst_69 {dimension_numbers = #tpu.dot_dimension_numbers<[1], [0], [0], [1], [0, 0, 1, 1], [], []>} : vector<4x64xf32>, vector<64x64xf32>, vector<4x64xf32> -> vector<4x64xf32>
    %c0_70 = arith.constant 0 : index
    %c0_71 = arith.constant 0 : index
    %c15 = arith.constant 15 : index
    %c0_72 = arith.constant 0 : index
    %165 = vector.load %arg6[%c0_70, %c0_71, %c15, %c0_72] : memref<1x4x16x64xf32, #tpu.memory_space<vmem>>, vector<1x4x1x64xf32>
    %166 = vector.shape_cast %165 : vector<1x4x1x64xf32> to vector<4x64xf32>
    %167 = vector.shape_cast %164 : vector<4x64xf32> to vector<1x4x1x64xf32>
    tpu.vector_store %arg6[%c0_70, %c0_71, %c15, %c0_72], %167 {strides = array<i32>} : memref<1x4x16x64xf32, #tpu.memory_space<vmem>>, vector<1x4x1x64xf32>,
    return
  }
  func.func @transform_0(%arg0: i32, %arg1: i32) -> (i32, i32, i32) {
    %c0_i32 = arith.constant 0 : i32
    %c0_i32_0 = arith.constant 0 : i32
    return %arg0, %c0_i32, %arg1 : i32, i32, i32
  }
  func.func @transform_1(%arg0: i32, %arg1: i32) -> (i32, i32) {
    %c0_i32 = arith.constant 0 : i32
    %c0_i32_0 = arith.constant 0 : i32
    %c0_i32_1 = arith.constant 0 : i32
    return %c0_i32, %c0_i32_0 : i32, i32
  }
  func.func @transform_2(%arg0: i32, %arg1: i32) -> (i32, i32) {
    %c0_i32 = arith.constant 0 : i32
    %c0_i32_0 = arith.constant 0 : i32
    %c0_i32_1 = arith.constant 0 : i32
    return %c0_i32, %c0_i32_0 : i32, i32
  }
  func.func @transform_3(%arg0: i32, %arg1: i32) -> (i32, i32) {
    %c0_i32 = arith.constant 0 : i32
    %c0_i32_0 = arith.constant 0 : i32
    %c0_i32_1 = arith.constant 0 : i32
    return %c0_i32, %c0_i32_0 : i32, i32
  }
  func.func @transform_4(%arg0: i32, %arg1: i32) -> (i32, i32, i32, i32) {
    %c0_i32 = arith.constant 0 : i32
    %c0_i32_0 = arith.constant 0 : i32
    %c0_i32_1 = arith.constant 0 : i32
    return %arg0, %c0_i32, %arg1, %c0_i32_0 : i32, i32, i32, i32
  }
}

</mosaic_0001>

<llo_original>
// kernel: tpu_custom_call.1
$region0: #{tpu_custom_call.1}
  #allocation0 [shape = 'u32[]', space=smem, size = 0x4, offset = 0x4, fixed_abs, tag = 'smem constant byte address 0x4 - core index']
  #allocation1 [shape = 'u32[144,128]{1,0:T(1,128)}', space=vmem, size = 0x12000, scoped, tag = 'internal scratch']
  %s0 = inlined_call_operand.vmem [shape: f32[2,8,256], index: 0, kind: input, shape index: {}]
  %s1 = inlined_call_operand.vmem [shape: f32[16,8], index: 1, kind: input, shape index: {}]
  %s2 = inlined_call_operand.vmem [shape: f32[16,1], index: 2, kind: input, shape index: {}]
  %s3 = inlined_call_operand.hbm [shape: f32[64,64], index: 3, kind: input, shape index: {}]
  %s4 = inlined_call_operand.hbm [shape: f32[2,4,16,64], index: 4, kind: output, shape index: {}]
  %s5 = sld [smem:[#allocation0]]
  $region53: #{tpu_custom_call.1} parent=0
    _
  %s7 = ssub.s32 1, %s5
  %s8 = scalar_select 0, %s7, %s5
  $region1: #{tpu_custom_call.1} parent=0
    #allocation2 [shape = 'u8[32768]{0}', space=vmem, size = 0x8000, scoped, tag = 'input window, operand 3, single buffered']
    #allocation3 [shape = 's32[2]{0}', space=sflag, size = 0x8, scoped, tag = 'scoped memory for tpu_custom_call.1']
    #allocation4 [shape = 's32[2]{0}', space=sflag, size = 0x8, scoped, tag = 'scoped memory for tpu_custom_call.1']
    #allocation5 [shape = 'u8[65536]{0}', space=vmem, size = 0x10000, scoped, tag = 'output window, operand 0']
    %9 = vsyncpa [#allocation3], 0
    %10 = vsyncpa [#allocation4], 0
    %s11 = scalar_lea.sflag [#allocation4], 1
    %12 = vsyncpa %s11, 0
    loop: start=0, step=1, limit=4
    $region2: #{tpu_custom_call.1} parent=1 // loop_pre_header
      _
    $region3: #{tpu_custom_call.1} parent=1 // loop_header
      %s14 = sphi 0, %s18
      %p15 = scmp.ge.s32.totalorder %s14, 4
      %s21 = sphi 0, %s33
      %s22 = sphi 0, %s29
      %s23 = sphi 0, %s21
      %s24 = sphi 0, %s22
      %s25 = sphi 0, %s23
      %s26 = sphi 0, %s24
      %s38 = sphi 0, %s40
      %s41 = sphi 0, %s38
      %s42 = sphi 0, %s41
      %s58 = sphi 0, %s42
      %s62 = sphi 0, %s62
      %s64 = sphi 0, %s62
      %s65 = sphi 0, %s64
      %s79 = sphi 0, %s65
      %s83 = sphi 0, %s83
      %s85 = sphi 0, %s83
      %s86 = sphi 0, %s85
      %s100 = sphi 0, %s86
      %s104 = sphi 0, %s104
      %s106 = sphi 0, %s104
      %s107 = sphi 0, %s106
      %s121 = sphi 0, %s107
      %s129 = sphi 0, %s131
      %s132 = sphi 0, %s129
      %s133 = sphi 0, %s132
      %s149 = sphi 0, %s133
    $region4: #{tpu_custom_call.1} parent=1 // loop_header_branch
      %17 = sbr.rel (%p15) target = $region8
    $region5: #{tpu_custom_call.1} parent=1 // loop_body
      %s19 = ssub.s32 %s14, 1
      %s20 = ssub.s32 %s14, 2
      %s27 = sadd.s32 1, %s22
      %p28 = scmp.ge.s32.totalorder %s27, 1
      %s29 = scalar_select %p28, 0, %s27
      %s30 = sadd.s32 1, %s21
      %s31 = scalar_select %p28, %s30, %s21
      %p32 = scmp.ge.s32.totalorder %s31, 2
      %s33 = scalar_select %p32, 0, %s31
      %s34 = ssub.s32 %s21, %s33
      %s35 = ssub.s32 %s22, %s29
      %s36 = sor.u32 %s34, %s35
      %p37 = scmp.eq.s32.totalorder %s36, 0
      %s39 = sadd.s32 %s38, 1
      %s40 = scalar_select %p37, %s38, %s39
      %p43 = pneg %p37
      %p44 = scmp.eq.s32.totalorder %s14, 1
      %p45 = por %p43, %p44
      %p46 = scmp.ne.s32.totalorder %s38, %s41
      %p47 = scmp.eq.s32.totalorder %s14, 0
      %p48 = por %p46, %p47
      %p49 = scmp.ne.s32.totalorder %s38, %s41
      %p50 = scmp.eq.s32.totalorder %s19, 1
      %p51 = por %p49, %p50
      %p52 = scmp.ne.s32.totalorder %s41, %s42
      %p53 = scmp.eq.s32.totalorder %s19, 0
      %p54 = por %p52, %p53
      %p55 = scmp.ne.s32.totalorder %s41, %s42
      %p56 = scmp.eq.s32.totalorder %s20, 1
      %p57 = por %p55, %p56
      %p59 = scmp.ne.s32.totalorder %s42, %s58
      %p60 = scmp.eq.s32.totalorder %s20, 0
      %p61 = por %p59, %p60
      %s63 = sadd.s32 %s62, 1
      %p66 = scmp.eq.s32.totalorder %s14, 1
      %p67 = scmp.ne.s32.totalorder %s62, %s64
      %p68 = scmp.eq.s32.totalorder %s14, 0
      %p69 = por %p67, %p68
      %p70 = scmp.ne.s32.totalorder %s62, %s64
      %p71 = scmp.eq.s32.totalorder %s19, 1
      %p72 = por %p70, %p71
      %p73 = scmp.ne.s32.totalorder %s64, %s65
      %p74 = scmp.eq.s32.totalorder %s19, 0
      %p75 = por %p73, %p74
      %p76 = scmp.ne.s32.totalorder %s64, %s65
      %p77 = scmp.eq.s32.totalorder %s20, 1
      %p78 = por %p76, %p77
      %p80 = scmp.ne.s32.totalorder %s65, %s79
      %p81 = scmp.eq.s32.totalorder %s20, 0
      %p82 = por %p80, %p81
      %s84 = sadd.s32 %s83, 1
      %p87 = scmp.eq.s32.totalorder %s14, 1
      %p88 = scmp.ne.s32.totalorder %s83, %s85
      %p89 = scmp.eq.s32.totalorder %s14, 0
      %p90 = por %p88, %p89
      %p91 = scmp.ne.s32.totalorder %s83, %s85
      %p92 = scmp.eq.s32.totalorder %s19, 1
      %p93 = por %p91, %p92
      %p94 = scmp.ne.s32.totalorder %s85, %s86
      %p95 = scmp.eq.s32.totalorder %s19, 0
      %p96 = por %p94, %p95
      %p97 = scmp.ne.s32.totalorder %s85, %s86
      %p98 = scmp.eq.s32.totalorder %s20, 1
      %p99 = por %p97, %p98
      %p101 = scmp.ne.s32.totalorder %s86, %s100
      %p102 = scmp.eq.s32.totalorder %s20, 0
      %p103 = por %p101, %p102
      %s105 = sadd.s32 %s104, 1
      %p108 = scmp.eq.s32.totalorder %s14, 1
      %p109 = scmp.ne.s32.totalorder %s104, %s106
      %p110 = scmp.eq.s32.totalorder %s14, 0
      %p111 = por %p109, %p110
      %p112 = scmp.ne.s32.totalorder %s104, %s106
      %p113 = scmp.eq.s32.totalorder %s19, 1
      %p114 = por %p112, %p113
      %p115 = scmp.ne.s32.totalorder %s106, %s107
      %p116 = scmp.eq.s32.totalorder %s19, 0
      %p117 = por %p115, %p116
      %p118 = scmp.ne.s32.totalorder %s106, %s107
      %p119 = scmp.eq.s32.totalorder %s20, 1
      %p120 = por %p118, %p119
      %p122 = scmp.ne.s32.totalorder %s107, %s121
      %p123 = scmp.eq.s32.totalorder %s20, 0
      %p124 = por %p122, %p123
      %s125 = ssub.s32 %s21, %s33
      %s126 = ssub.s32 %s22, %s29
      %s127 = sor.u32 %s125, %s126
      %p128 = scmp.eq.s32.totalorder %s127, 0
      %s130 = sadd.s32 %s129, 1
      %s131 = scalar_select %p128, %s129, %s130
      %p134 = pneg %p128
      %p135 = scmp.eq.s32.totalorder %s14, 1
      %p136 = por %p134, %p135
      %p137 = scmp.ne.s32.totalorder %s129, %s132
      %p138 = scmp.eq.s32.totalorder %s14, 0
      %p139 = por %p137, %p138
      %p140 = scmp.ne.s32.totalorder %s129, %s132
      %p141 = scmp.eq.s32.totalorder %s19, 1
      %p142 = por %p140, %p141
      %p143 = scmp.ne.s32.totalorder %s132, %s133
      %p144 = scmp.eq.s32.totalorder %s19, 0
      %p145 = por %p143, %p144
      %p146 = scmp.ne.s32.totalorder %s132, %s133
      %p147 = scmp.eq.s32.totalorder %s20, 1
      %p148 = por %p146, %p147
      %p150 = scmp.ne.s32.totalorder %s133, %s149
      %p151 = scmp.eq.s32.totalorder %s20, 0
      %p152 = por %p150, %p151
      %p153 = scmp.le.s32.totalorder 1, %s14
      %p154 = scmp.lt.s32.totalorder %s14, 3
      %p155 = pnand %p153, %p154
      %p156 = pneg %p155
      // Predicated region
      $region9: #{tpu_custom_call.1} parent=5 // pred_check
        _
      $region10: #{tpu_custom_call.1} parent=5 // pred_check_branch
        %158 = sbr.rel (%p155) target = $region12
      $region11: #{tpu_custom_call.1} parent=5 // pred_region
        %s159 = ssub.s32 %s14, 1
        // Predicated region
        $region13: #{tpu_custom_call.1} parent=11 // pred_check
          %p160 = pneg %p75
        $region14: #{tpu_custom_call.1} parent=11 // pred_check_branch
          %162 = sbr.rel (%p160) target = $region16
        $region15: #{tpu_custom_call.1} parent=11 // pred_region
          _
        $region16: #{tpu_custom_call.1} parent=11 // pred_fallthru
          _
        // Predicated region
        $region17: #{tpu_custom_call.1} parent=11 // pred_check
          %p163 = pneg %p96
        $region18: #{tpu_custom_call.1} parent=11 // pred_check_branch
          %165 = sbr.rel (%p163) target = $region20
        $region19: #{tpu_custom_call.1} parent=11 // pred_region
          _
        $region20: #{tpu_custom_call.1} parent=11 // pred_fallthru
          _
        // Predicated region
        $region21: #{tpu_custom_call.1} parent=11 // pred_check
          %p166 = pneg %p117
        $region22: #{tpu_custom_call.1} parent=11 // pred_check_branch
          %168 = sbr.rel (%p166) target = $region24
        $region23: #{tpu_custom_call.1} parent=11 // pred_region
          %s170 = ssub.s32 1024, 1024
          %171 = vsyncadd [#allocation3], %s170
          %s172 = sshll.u32 [#allocation2], 4
          %s173 = int_to_ptr.vmem [resolvable:$true] %s172
          %178 = dma.hbm_to_vmem [thread:$0]  %s3, 1024, %s173, [#allocation3], 128, 128, 8
        $region24: #{tpu_custom_call.1} parent=11 // pred_fallthru
          _
      $region12: #{tpu_custom_call.1} parent=5 // pred_fallthru
        _
      %p179 = scmp.lt.s32.totalorder %s14, 2
      // Predicated region
      $region25: #{tpu_custom_call.1} parent=5 // pred_check
        %p180 = pneg %p179
      $region26: #{tpu_custom_call.1} parent=5 // pred_check_branch
        %182 = sbr.rel (%p180) target = $region28
      $region27: #{tpu_custom_call.1} parent=5 // pred_region
        // Predicated region
        $region29: #{tpu_custom_call.1} parent=27 // pred_check
          %p183 = pneg %p48
        $region30: #{tpu_custom_call.1} parent=27 // pred_check_branch
          %185 = sbr.rel (%p183) target = $region32
        $region31: #{tpu_custom_call.1} parent=27 // pred_region
          %s186 = smul.u32 2, %s22
          %p187 = scmp.lt.s32.totalorder %s21, 1
          %s188 = scalar_select %p187, %s21, 1
          %p189 = scmp.lt.s32.totalorder %s186, 1
          %s190 = scalar_select %p189, %s186, 1
          %s191 = smul.addr %s188, 2
          %s192 = sadd.s32 %s190, %s191
          %s193 = smul.addr %s192, 8
          %s194 = scalar_lea.vmem %s0, %s193
          %s195 = smul.u32 2, %s22
        $region32: #{tpu_custom_call.1} parent=27 // pred_fallthru
          _
      $region28: #{tpu_custom_call.1} parent=5 // pred_fallthru
        _
      %p196 = scmp.le.s32.totalorder 1, %s14
      %p197 = scmp.lt.s32.totalorder %s14, 3
      %p198 = pnand %p196, %p197
      %p199 = pneg %p198
      // Predicated region
      $region33: #{tpu_custom_call.1} parent=5 // pred_check
        _
      $region34: #{tpu_custom_call.1} parent=5 // pred_check_branch
        %201 = sbr.rel (%p198) target = $region36
      $region35: #{tpu_custom_call.1} parent=5 // pred_region
        %s202 = ssub.s32 %s14, 1
        // Predicated region
        $region37: #{tpu_custom_call.1} parent=35 // pred_check
          %p203 = pneg %p117
        $region38: #{tpu_custom_call.1} parent=35 // pred_check_branch
          %205 = sbr.rel (%p203) target = $region40
        $region39: #{tpu_custom_call.1} parent=35 // pred_region
          %206 = dma.done [#allocation3], 1024
        $region40: #{tpu_custom_call.1} parent=35 // pred_fallthru
          _
        %s207 = smul.u32 2, %s24
        %p208 = scmp.lt.s32.totalorder %s23, 1
        %s209 = scalar_select %p208, %s23, 1
        %p210 = scmp.lt.s32.totalorder %s207, 1
        %s211 = scalar_select %p210, %s207, 1
        %s212 = smul.addr %s209, 2
        %s213 = sadd.s32 %s211, %s212
        %s214 = smul.addr %s213, 8
        %s215 = scalar_lea.vmem %s0, %s214
        %p216 = pneg %p54
        %p217 = pneg %p51
        %p218 = pneg %p75
        %p219 = pneg %p72
        %p220 = pneg %p96
        %p221 = pneg %p93
        %p222 = pneg %p117
        %p223 = pneg %p114
        %p224 = pneg %p145
        %p225 = pneg %p142
        %s226 = sand.u32 %s132, 1
        %s227 = scalar_lea.sflag [#allocation4], %s226
        %s228 = sand.u32 %s132, 1
        %s229 = smul.addr %s228, 64
        %s230 = scalar_lea.vmem [#allocation5], %s229
        %s231 = smul.u32 2, %s24
        %p232 = scmp.lt.s32.totalorder %s23, 1
        %s233 = scalar_select %p232, %s23, 1
        %p234 = scmp.lt.s32.totalorder %s231, 1
        %s235 = scalar_select %p234, %s231, 1
        %s236 = smul.addr %s233, 2
        %s237 = sadd.s32 %s235, %s236
        %s238 = smul.addr %s237, 8
        %s239 = scalar_lea.vmem %s0, %s238
        %s240 = smul.u32 2, %s24
        %s241 = smul.u32 2, %s24
        %v242 = vld [vmem:[%s239] sm:$0xff]
        %v243 = vld [vmem:[%s239 + $0x8] sm:$0xff]
        %v244 = vld [vmem:[%s1] sm:$0xff]
        %v245 = vld [vmem:[%s1 + $0x8] sm:$0xff]
        %v246 = vld [vmem:[%s2] sm:$0xff]
        %v247 = vld [vmem:[%s2 + $0x8] sm:$0xff]
        %249 = vset.pattern.permute.xlu0 0
        %250 = vperm.xlu0 %249, %v246
        %v251 = vpop.permute.xlu0 %250
        %254 = vset.pattern.permute.xlu0 0
        %255 = vperm.xlu0 %254, %v247
        %v256 = vpop.permute.xlu0 %255
        %vm258 = vcmask 64512
        %v260 = vsel %vm258, %v244, 0
        %v263 = vsel %vm258, %v245, 0
        %265 = vmatprep.subr.mxu0 0.0
        %266 = vmatpush1.msra.mxu0 0.0
        %267 = vmatprep.subr.mxu0 0.0
        %268 = vmatpush1.msra.mxu0 0.0
        %269 = vmatprep.subr.mxu0 0.0
        %270 = vmatpush1.msra.mxu0 0.0
        %271 = vmatprep.subr.mxu0 0.0
        %272 = vmatpush1.msra.mxu0 0.0
        %273 = vmatprep.subr.mxu0 0.0
        %274 = vmatpush1.msra.mxu0 0.0
        %275 = vmatprep.subr.mxu0 0.0
        %276 = vmatpush1.msra.mxu0 0.0
        %277 = vmatprep.subr.mxu0 0.0
        %278 = vmatpush1.msra.mxu0 0.0
        %279 = vmatprep.subr.mxu0 0.0
        %280 = vmatpush1.msra.mxu0 0.0
        %281 = vmatprep.subr.mxu0 0.0
        %282 = vmatpush1.msra.mxu0 0.0
        %283 = vmatprep.subr.mxu0 0.0
        %284 = vmatpush1.msra.mxu0 0.0
        %285 = vmatprep.subr.mxu0 0.0
        %286 = vmatpush1.msra.mxu0 0.0
        %287 = vmatprep.subr.mxu0 0.0
        %288 = vmatpush1.msra.mxu0 0.0
        %289 = vmatprep.subr.mxu0 0.0
        %290 = vmatpush1.msra.mxu0 0.0
        %291 = vmatprep.subr.mxu0 0.0
        %292 = vmatpush1.msra.mxu0 0.0
        %293 = vmatprep.subr.mxu0 0.0
        %294 = vmatpush1.msra.mxu0 0.0
        %295 = vmatprep.subr.mxu0 %v243
        %296 = vmatpush1.msra.mxu0 %v242
        %297 = vmatprep.subr.mxu0 0.0
        %298 = vmatpush2.msra.mxu0 0.0
        %299 = vmatprep.subr.mxu0 0.0
        %300 = vmatpush2.msra.mxu0 0.0
        %301 = vmatprep.subr.mxu0 0.0
        %302 = vmatpush2.msra.mxu0 0.0
        %303 = vmatprep.subr.mxu0 0.0
        %304 = vmatpush2.msra.mxu0 0.0
        %305 = vmatprep.subr.mxu0 0.0
        %306 = vmatpush2.msra.mxu0 0.0
        %307 = vmatprep.subr.mxu0 0.0
        %308 = vmatpush2.msra.mxu0 0.0
        %309 = vmatprep.subr.mxu0 0.0
        %310 = vmatpush2.msra.mxu0 0.0
        %311 = vmatprep.subr.mxu0 0.0
        %312 = vmatpush2.msra.mxu0 0.0
        %313 = vmatprep.subr.mxu0 0.0
        %314 = vmatpush2.msra.mxu0 0.0
        %315 = vmatprep.subr.mxu0 0.0
        %316 = vmatpush2.msra.mxu0 0.0
        %317 = vmatprep.subr.mxu0 0.0
        %318 = vmatpush2.msra.mxu0 0.0
        %319 = vmatprep.subr.mxu0 0.0
        %320 = vmatpush2.msra.mxu0 0.0
        %321 = vmatprep.subr.mxu0 0.0
        %322 = vmatpush2.msra.mxu0 0.0
        %323 = vmatprep.subr.mxu0 0.0
        %324 = vmatpush2.msra.mxu0 0.0
        %325 = vmatprep.subr.mxu0 0.0
        %326 = vmatpush2.msra.mxu0 0.0
        %327 = vmatprep.subr.mxu0 0.0
        %328 = vmatpush2.msra.mxu0 0.0
        %329 = vmatprep.mubr.f32.mxu0 0.0
        %330 = vmatmul.mubr.f32.gmra.mxu0 %v260
        %v331 = vpop.f32.mrf.mxu0
        %v332 = vadd.f32 %v251, %v331
        %v333 = vpop.f32.mrf.mxu0
        %v334 = vadd.f32 %v251, %v333
        %335 = vmatprep.mubr.f32.mxu0 0.0
        %336 = vmatmul.mubr.f32.gmra.mxu0 %v263
        %v337 = vpop.f32.mrf.mxu0
        %v338 = vadd.f32 %v256, %v337
        %v339 = vpop.f32.mrf.mxu0
        %v340 = vadd.f32 %v256, %v339
        %341 = vdwg.mxu0
        %v342 = vld [vmem:[#allocation2] sm:$0xff]
        %v343 = vld [vmem:[#allocation2 + $0x8] sm:$0xff]
        %v344 = vld [vmem:[#allocation2 + $0x10] sm:$0xff]
        %v345 = vld [vmem:[#allocation2 + $0x18] sm:$0xff]
        %v346 = vld [vmem:[#allocation2 + $0x20] sm:$0xff]
        %v347 = vld [vmem:[#allocation2 + $0x28] sm:$0xff]
        %v348 = vld [vmem:[#allocation2 + $0x30] sm:$0xff]
        %v349 = vld [vmem:[#allocation2 + $0x38] sm:$0xff]
        %v351 = vrot.slane %v332, 4
        %352 = vrot.lane.b32.xlu0 %v351, 16
        %v353 = vpop.permute.xlu0 %352
        %356 = vrot.lane.b32.xlu0 %v338, 32
        %v357 = vpop.permute.xlu0 %356
        %v359 = vrot.slane %v338, 4
        %360 = vrot.lane.b32.xlu0 %v359, 48
        %v361 = vpop.permute.xlu0 %360
        %vm363 = vcmask 130048
        %v364 = vsel %vm363, %v332, %v353
        %vm365 = vcmask 261120
        %v366 = vsel %vm365, %v364, %v357
        %vm367 = vcmask 392192
        %v368 = vsel %vm367, %v366, %v361
        %vm369 = vcmask 523264
        %v371 = vsel %vm369, %v368, 0
        %373 = vmatprep.subr.mxu0 0.0
        %374 = vmatpush1.msra.mxu0 0.0
        %375 = vmatprep.subr.mxu0 0.0
        %376 = vmatpush1.msra.mxu0 0.0
        %377 = vmatprep.subr.mxu0 0.0
        %378 = vmatpush1.msra.mxu0 0.0
        %379 = vmatprep.subr.mxu0 0.0
        %380 = vmatpush1.msra.mxu0 0.0
        %381 = vmatprep.subr.mxu0 0.0
        %382 = vmatpush1.msra.mxu0 0.0
        %383 = vmatprep.subr.mxu0 0.0
        %384 = vmatpush1.msra.mxu0 0.0
        %385 = vmatprep.subr.mxu0 0.0
        %386 = vmatpush1.msra.mxu0 0.0
        %387 = vmatprep.subr.mxu0 0.0
        %388 = vmatpush1.msra.mxu0 0.0
        %389 = vmatprep.subr.mxu0 0.0
        %390 = vmatpush1.msra.mxu0 %v349
        %391 = vmatprep.subr.mxu0 0.0
        %392 = vmatpush1.msra.mxu0 %v348
        %393 = vmatprep.subr.mxu0 0.0
        %394 = vmatpush1.msra.mxu0 %v347
        %395 = vmatprep.subr.mxu0 0.0
        %396 = vmatpush1.msra.mxu0 %v346
        %397 = vmatprep.subr.mxu0 0.0
        %398 = vmatpush1.msra.mxu0 %v345
        %399 = vmatprep.subr.mxu0 0.0
        %400 = vmatpush1.msra.mxu0 %v344
        %401 = vmatprep.subr.mxu0 0.0
        %402 = vmatpush1.msra.mxu0 %v343
        %403 = vmatprep.subr.mxu0 0.0
        %404 = vmatpush1.msra.mxu0 %v342
        %405 = vmatprep.subr.mxu0 0.0
        %406 = vmatpush2.msra.mxu0 0.0
        %407 = vmatprep.subr.mxu0 0.0
        %408 = vmatpush2.msra.mxu0 0.0
        %409 = vmatprep.subr.mxu0 0.0
        %410 = vmatpush2.msra.mxu0 0.0
        %411 = vmatprep.subr.mxu0 0.0
        %412 = vmatpush2.msra.mxu0 0.0
        %413 = vmatprep.subr.mxu0 0.0
        %414 = vmatpush2.msra.mxu0 0.0
        %415 = vmatprep.subr.mxu0 0.0
        %416 = vmatpush2.msra.mxu0 0.0
        %417 = vmatprep.subr.mxu0 0.0
        %418 = vmatpush2.msra.mxu0 0.0
        %419 = vmatprep.subr.mxu0 0.0
        %420 = vmatpush2.msra.mxu0 0.0
        %421 = vmatprep.subr.mxu0 0.0
        %422 = vmatpush2.msra.mxu0 0.0
        %423 = vmatprep.subr.mxu0 0.0
        %424 = vmatpush2.msra.mxu0 0.0
        %425 = vmatprep.subr.mxu0 0.0
        %426 = vmatpush2.msra.mxu0 0.0
        %427 = vmatprep.subr.mxu0 0.0
        %428 = vmatpush2.msra.mxu0 0.0
        %429 = vmatprep.subr.mxu0 0.0
        %430 = vmatpush2.msra.mxu0 0.0
        %431 = vmatprep.subr.mxu0 0.0
        %432 = vmatpush2.msra.mxu0 0.0
        %433 = vmatprep.subr.mxu0 0.0
        %434 = vmatpush2.msra.mxu0 0.0
        %435 = vmatprep.subr.mxu0 0.0
        %436 = vmatpush2.msra.mxu0 0.0
        %437 = vmatprep.mubr.f32.mxu0 0.0
        %438 = vmatmul.mubr.f32.gmra.mxu0 %v371
        %v439 = vpop.f32.mrf.mxu0
        %v440 = vadd.f32 0.0, %v439
        %v441 = vpop.f32.mrf.mxu0
        %442 = vdwg.mxu0
        %v445 = vunpack.c.l.s4 1966171168
        %v446 = vunpack.c.0.s8 %v445
        %v447 = vlaneseq
        %v448 = vshrl.u32 %v447, 7
        %v449 = vsub.s32 %v446, %v448
        %v450 = vrot.slane %v440, %v449
        %v451 = vcombine.high %v450, %v450
        %v453 = vunpack.c.l.s4 1966171168
        %v454 = vunpack.c.0.s8 %v453
        %v455 = vlaneseq
        %v456 = vshrl.u32 %v455, 7
        %v457 = vsub.s32 %v454, %v456
        %v458 = vrot.slane %v450, %v457
        %v460 = vunpack.c.l.s4 1966171168
        %v461 = vunpack.c.0.s8 %v460
        %v462 = vlaneseq
        %v463 = vshrl.u32 %v462, 7
        %v464 = vsub.s32 %v461, %v463
        %v465 = vrot.slane %v451, %v464
        %v466 = vcombine.high %v458, %v458
        %v467 = vcombine.high %v465, %v465
        %vm472 = vcmask 516096
        %473 = vst.msk [vmem:[%s230] sm:$0x1] %vm472, %v458
        %474 = vst.msk [vmem:[%s230 + $0x10] sm:$0x1] %vm472, %v465
        %475 = vst.msk [vmem:[%s230 + $0x20] sm:$0x1] %vm472, %v466
        %476 = vst.msk [vmem:[%s230 + $0x30] sm:$0x1] %vm472, %v467
        %477 = vrot.lane.b32.xlu0 %v332, 112
        %v478 = vpop.permute.xlu0 %477
        %481 = vrot.lane.b32.xlu0 %v338, 16
        %v482 = vpop.permute.xlu0 %481
        %484 = vrot.lane.b32.xlu0 %v359, 32
        %v485 = vpop.permute.xlu0 %484
        %v487 = vsel %vm363, %v478, %v351
        %v488 = vsel %vm365, %v487, %v482
        %v489 = vsel %vm367, %v488, %v485
        %v491 = vsel %vm369, %v489, 0
        %493 = vmatprep.subr.mxu0 0.0
        %494 = vmatpush1.msra.mxu0 0.0
        %495 = vmatprep.subr.mxu0 0.0
        %496 = vmatpush1.msra.mxu0 0.0
        %497 = vmatprep.subr.mxu0 0.0
        %498 = vmatpush1.msra.mxu0 0.0
        %499 = vmatprep.subr.mxu0 0.0
        %500 = vmatpush1.msra.mxu0 0.0
        %501 = vmatprep.subr.mxu0 0.0
        %502 = vmatpush1.msra.mxu0 0.0
        %503 = vmatprep.subr.mxu0 0.0
        %504 = vmatpush1.msra.mxu0 0.0
        %505 = vmatprep.subr.mxu0 0.0
        %506 = vmatpush1.msra.mxu0 0.0
        %507 = vmatprep.subr.mxu0 0.0
        %508 = vmatpush1.msra.mxu0 0.0
        %509 = vmatprep.subr.mxu0 0.0
        %510 = vmatpush1.msra.mxu0 %v349
        %511 = vmatprep.subr.mxu0 0.0
        %512 = vmatpush1.msra.mxu0 %v348
        %513 = vmatprep.subr.mxu0 0.0
        %514 = vmatpush1.msra.mxu0 %v347
        %515 = vmatprep.subr.mxu0 0.0
        %516 = vmatpush1.msra.mxu0 %v346
        %517 = vmatprep.subr.mxu0 0.0
        %518 = vmatpush1.msra.mxu0 %v345
        %519 = vmatprep.subr.mxu0 0.0
        %520 = vmatpush1.msra.mxu0 %v344
        %521 = vmatprep.subr.mxu0 0.0
        %522 = vmatpush1.msra.mxu0 %v343
        %523 = vmatprep.subr.mxu0 0.0
        %524 = vmatpush1.msra.mxu0 %v342
        %525 = vmatprep.subr.mxu0 0.0
        %526 = vmatpush2.msra.mxu0 0.0
        %527 = vmatprep.subr.mxu0 0.0
        %528 = vmatpush2.msra.mxu0 0.0
        %529 = vmatprep.subr.mxu0 0.0
        %530 = vmatpush2.msra.mxu0 0.0
        %531 = vmatprep.subr.mxu0 0.0
        %532 = vmatpush2.msra.mxu0 0.0
        %533 = vmatprep.subr.mxu0 0.0
        %534 = vmatpush2.msra.mxu0 0.0
        %535 = vmatprep.subr.mxu0 0.0
        %536 = vmatpush2.msra.mxu0 0.0
        %537 = vmatprep.subr.mxu0 0.0
        %538 = vmatpush2.msra.mxu0 0.0
        %539 = vmatprep.subr.mxu0 0.0
        %540 = vmatpush2.msra.mxu0 0.0
        %541 = vmatprep.subr.mxu0 0.0
        %542 = vmatpush2.msra.mxu0 0.0
        %543 = vmatprep.subr.mxu0 0.0
        %544 = vmatpush2.msra.mxu0 0.0
        %545 = vmatprep.subr.mxu0 0.0
        %546 = vmatpush2.msra.mxu0 0.0
        %547 = vmatprep.subr.mxu0 0.0
        %548 = vmatpush2.msra.mxu0 0.0
        %549 = vmatprep.subr.mxu0 0.0
        %550 = vmatpush2.msra.mxu0 0.0
        %551 = vmatprep.subr.mxu0 0.0
        %552 = vmatpush2.msra.mxu0 0.0
        %553 = vmatprep.subr.mxu0 0.0
        %554 = vmatpush2.msra.mxu0 0.0
        %555 = vmatprep.subr.mxu0 0.0
        %556 = vmatpush2.msra.mxu0 0.0
        %557 = vmatprep.mubr.f32.mxu0 0.0
        %558 = vmatmul.mubr.f32.gmra.mxu0 %v491
        %v559 = vpop.f32.mrf.mxu0
        %v560 = vadd.f32 0.0, %v559
        %v561 = vpop.f32.mrf.mxu0
        %562 = vdwg.mxu0
        %v565 = vunpack.c.l.s4 1966171168
        %v566 = vunpack.c.0.s8 %v565
        %v567 = vlaneseq
        %v568 = vshrl.u32 %v567, 7
        %v569 = vsub.s32 %v566, %v568
        %v570 = vrot.slane %v560, %v569
        %v571 = vcombine.high %v570, %v570
        %v573 = vunpack.c.l.s4 1966171168
        %v574 = vunpack.c.0.s8 %v573
        %v575 = vlaneseq
        %v576 = vshrl.u32 %v575, 7
        %v577 = vsub.s32 %v574, %v576
        %v578 = vrot.slane %v570, %v577
        %v580 = vunpack.c.l.s4 1966171168
        %v581 = vunpack.c.0.s8 %v580
        %v582 = vlaneseq
        %v583 = vshrl.u32 %v582, 7
        %v584 = vsub.s32 %v581, %v583
        %v585 = vrot.slane %v571, %v584
        %v586 = vcombine.high %v578, %v578
        %v587 = vcombine.high %v585, %v585
        %592 = vst.msk [vmem:[%s230 + $0x1] sm:$0x1] %vm472, %v578
        %593 = vst.msk [vmem:[%s230 + $0x11] sm:$0x1] %vm472, %v585
        %594 = vst.msk [vmem:[%s230 + $0x21] sm:$0x1] %vm472, %v586
        %595 = vst.msk [vmem:[%s230 + $0x31] sm:$0x1] %vm472, %v587
        %596 = vrot.lane.b32.xlu0 %v332, 96
        %v597 = vpop.permute.xlu0 %596
        %599 = vrot.lane.b32.xlu0 %v351, 112
        %v600 = vpop.permute.xlu0 %599
        %602 = vrot.lane.b32.xlu0 %v359, 16
        %v603 = vpop.permute.xlu0 %602
        %v605 = vsel %vm363, %v597, %v600
        %v606 = vsel %vm365, %v605, %v338
        %v607 = vsel %vm367, %v606, %v603
        %v609 = vsel %vm369, %v607, 0
        %611 = vmatprep.subr.mxu0 0.0
        %612 = vmatpush1.msra.mxu0 0.0
        %613 = vmatprep.subr.mxu0 0.0
        %614 = vmatpush1.msra.mxu0 0.0
        %615 = vmatprep.subr.mxu0 0.0
        %616 = vmatpush1.msra.mxu0 0.0
        %617 = vmatprep.subr.mxu0 0.0
        %618 = vmatpush1.msra.mxu0 0.0
        %619 = vmatprep.subr.mxu0 0.0
        %620 = vmatpush1.msra.mxu0 0.0
        %621 = vmatprep.subr.mxu0 0.0
        %622 = vmatpush1.msra.mxu0 0.0
        %623 = vmatprep.subr.mxu0 0.0
        %624 = vmatpush1.msra.mxu0 0.0
        %625 = vmatprep.subr.mxu0 0.0
        %626 = vmatpush1.msra.mxu0 0.0
        %627 = vmatprep.subr.mxu0 0.0
        %628 = vmatpush1.msra.mxu0 %v349
        %629 = vmatprep.subr.mxu0 0.0
        %630 = vmatpush1.msra.mxu0 %v348
        %631 = vmatprep.subr.mxu0 0.0
        %632 = vmatpush1.msra.mxu0 %v347
        %633 = vmatprep.subr.mxu0 0.0
        %634 = vmatpush1.msra.mxu0 %v346
        %635 = vmatprep.subr.mxu0 0.0
        %636 = vmatpush1.msra.mxu0 %v345
        %637 = vmatprep.subr.mxu0 0.0
        %638 = vmatpush1.msra.mxu0 %v344
        %639 = vmatprep.subr.mxu0 0.0
        %640 = vmatpush1.msra.mxu0 %v343
        %641 = vmatprep.subr.mxu0 0.0
        %642 = vmatpush1.msra.mxu0 %v342
        %643 = vmatprep.subr.mxu0 0.0
        %644 = vmatpush2.msra.mxu0 0.0
        %645 = vmatprep.subr.mxu0 0.0
        %646 = vmatpush2.msra.mxu0 0.0
        %647 = vmatprep.subr.mxu0 0.0
        %648 = vmatpush2.msra.mxu0 0.0
        %649 = vmatprep.subr.mxu0 0.0
        %650 = vmatpush2.msra.mxu0 0.0
        %651 = vmatprep.subr.mxu0 0.0
        %652 = vmatpush2.msra.mxu0 0.0
        %653 = vmatprep.subr.mxu0 0.0
        %654 = vmatpush2.msra.mxu0 0.0
        %655 = vmatprep.subr.mxu0 0.0
        %656 = vmatpush2.msra.mxu0 0.0
        %657 = vmatprep.subr.mxu0 0.0
        %658 = vmatpush2.msra.mxu0 0.0
        %659 = vmatprep.subr.mxu0 0.0
        %660 = vmatpush2.msra.mxu0 0.0
        %661 = vmatprep.subr.mxu0 0.0
        %662 = vmatpush2.msra.mxu0 0.0
        %663 = vmatprep.subr.mxu0 0.0
        %664 = vmatpush2.msra.mxu0 0.0
        %665 = vmatprep.subr.mxu0 0.0
        %666 = vmatpush2.msra.mxu0 0.0
        %667 = vmatprep.subr.mxu0 0.0
        %668 = vmatpush2.msra.mxu0 0.0
        %669 = vmatprep.subr.mxu0 0.0
        %670 = vmatpush2.msra.mxu0 0.0
        %671 = vmatprep.subr.mxu0 0.0
        %672 = vmatpush2.msra.mxu0 0.0
        %673 = vmatprep.subr.mxu0 0.0
        %674 = vmatpush2.msra.mxu0 0.0
        %675 = vmatprep.mubr.f32.mxu0 0.0
        %676 = vmatmul.mubr.f32.gmra.mxu0 %v609
        %v677 = vpop.f32.mrf.mxu0
        %v678 = vadd.f32 0.0, %v677
        %v679 = vpop.f32.mrf.mxu0
        %680 = vdwg.mxu0
        %v683 = vunpack.c.l.s4 1966171168
        %v684 = vunpack.c.0.s8 %v683
        %v685 = vlaneseq
        %v686 = vshrl.u32 %v685, 7
        %v687 = vsub.s32 %v684, %v686
        %v688 = vrot.slane %v678, %v687
        %v689 = vcombine.high %v688, %v688
        %v691 = vunpack.c.l.s4 1966171168
        %v692 = vunpack.c.0.s8 %v691
        %v693 = vlaneseq
        %v694 = vshrl.u32 %v693, 7
        %v695 = vsub.s32 %v692, %v694
        %v696 = vrot.slane %v688, %v695
        %v698 = vunpack.c.l.s4 1966171168
        %v699 = vunpack.c.0.s8 %v698
        %v700 = vlaneseq
        %v701 = vshrl.u32 %v700, 7
        %v702 = vsub.s32 %v699, %v701
        %v703 = vrot.slane %v689, %v702
        %v704 = vcombine.high %v696, %v696
        %v705 = vcombine.high %v703, %v703
        %710 = vst.msk [vmem:[%s230 + $0x2] sm:$0x1] %vm472, %v696
        %711 = vst.msk [vmem:[%s230 + $0x12] sm:$0x1] %vm472, %v703
        %712 = vst.msk [vmem:[%s230 + $0x22] sm:$0x1] %vm472, %v704
        %713 = vst.msk [vmem:[%s230 + $0x32] sm:$0x1] %vm472, %v705
        %714 = vrot.lane.b32.xlu0 %v332, 80
        %v715 = vpop.permute.xlu0 %714
        %717 = vrot.lane.b32.xlu0 %v351, 96
        %v718 = vpop.permute.xlu0 %717
        %720 = vrot.lane.b32.xlu0 %v338, 112
        %v721 = vpop.permute.xlu0 %720
        %v724 = vsel %vm363, %v715, %v718
        %v725 = vsel %vm365, %v724, %v721
        %v726 = vsel %vm367, %v725, %v359
        %v728 = vsel %vm369, %v726, 0
        %730 = vmatprep.subr.mxu0 0.0
        %731 = vmatpush1.msra.mxu0 0.0
        %732 = vmatprep.subr.mxu0 0.0
        %733 = vmatpush1.msra.mxu0 0.0
        %734 = vmatprep.subr.mxu0 0.0
        %735 = vmatpush1.msra.mxu0 0.0
        %736 = vmatprep.subr.mxu0 0.0
        %737 = vmatpush1.msra.mxu0 0.0
        %738 = vmatprep.subr.mxu0 0.0
        %739 = vmatpush1.msra.mxu0 0.0
        %740 = vmatprep.subr.mxu0 0.0
        %741 = vmatpush1.msra.mxu0 0.0
        %742 = vmatprep.subr.mxu0 0.0
        %743 = vmatpush1.msra.mxu0 0.0
        %744 = vmatprep.subr.mxu0 0.0
        %745 = vmatpush1.msra.mxu0 0.0
        %746 = vmatprep.subr.mxu0 0.0
        %747 = vmatpush1.msra.mxu0 %v349
        %748 = vmatprep.subr.mxu0 0.0
        %749 = vmatpush1.msra.mxu0 %v348
        %750 = vmatprep.subr.mxu0 0.0
        %751 = vmatpush1.msra.mxu0 %v347
        %752 = vmatprep.subr.mxu0 0.0
        %753 = vmatpush1.msra.mxu0 %v346
        %754 = vmatprep.subr.mxu0 0.0
        %755 = vmatpush1.msra.mxu0 %v345
        %756 = vmatprep.subr.mxu0 0.0
        %757 = vmatpush1.msra.mxu0 %v344
        %758 = vmatprep.subr.mxu0 0.0
        %759 = vmatpush1.msra.mxu0 %v343
        %760 = vmatprep.subr.mxu0 0.0
        %761 = vmatpush1.msra.mxu0 %v342
        %762 = vmatprep.subr.mxu0 0.0
        %763 = vmatpush2.msra.mxu0 0.0
        %764 = vmatprep.subr.mxu0 0.0
        %765 = vmatpush2.msra.mxu0 0.0
        %766 = vmatprep.subr.mxu0 0.0
        %767 = vmatpush2.msra.mxu0 0.0
        %768 = vmatprep.subr.mxu0 0.0
        %769 = vmatpush2.msra.mxu0 0.0
        %770 = vmatprep.subr.mxu0 0.0
        %771 = vmatpush2.msra.mxu0 0.0
        %772 = vmatprep.subr.mxu0 0.0
        %773 = vmatpush2.msra.mxu0 0.0
        %774 = vmatprep.subr.mxu0 0.0
        %775 = vmatpush2.msra.mxu0 0.0
        %776 = vmatprep.subr.mxu0 0.0
        %777 = vmatpush2.msra.mxu0 0.0
        %778 = vmatprep.subr.mxu0 0.0
        %779 = vmatpush2.msra.mxu0 0.0
        %780 = vmatprep.subr.mxu0 0.0
        %781 = vmatpush2.msra.mxu0 0.0
        %782 = vmatprep.subr.mxu0 0.0
        %783 = vmatpush2.msra.mxu0 0.0
        %784 = vmatprep.subr.mxu0 0.0
        %785 = vmatpush2.msra.mxu0 0.0
        %786 = vmatprep.subr.mxu0 0.0
        %787 = vmatpush2.msra.mxu0 0.0
        %788 = vmatprep.subr.mxu0 0.0
        %789 = vmatpush2.msra.mxu0 0.0
        %790 = vmatprep.subr.mxu0 0.0
        %791 = vmatpush2.msra.mxu0 0.0
        %792 = vmatprep.subr.mxu0 0.0
        %793 = vmatpush2.msra.mxu0 0.0
        %794 = vmatprep.mubr.f32.mxu0 0.0
        %795 = vmatmul.mubr.f32.gmra.mxu0 %v728
        %v796 = vpop.f32.mrf.mxu0
        %v797 = vadd.f32 0.0, %v796
        %v798 = vpop.f32.mrf.mxu0
        %799 = vdwg.mxu0
        %v802 = vunpack.c.l.s4 1966171168
        %v803 = vunpack.c.0.s8 %v802
        %v804 = vlaneseq
        %v805 = vshrl.u32 %v804, 7
        %v806 = vsub.s32 %v803, %v805
        %v807 = vrot.slane %v797, %v806
        %v808 = vcombine.high %v807, %v807
        %v810 = vunpack.c.l.s4 1966171168
        %v811 = vunpack.c.0.s8 %v810
        %v812 = vlaneseq
        %v813 = vshrl.u32 %v812, 7
        %v814 = vsub.s32 %v811, %v813
        %v815 = vrot.slane %v807, %v814
        %v817 = vunpack.c.l.s4 1966171168
        %v818 = vunpack.c.0.s8 %v817
        %v819 = vlaneseq
        %v820 = vshrl.u32 %v819, 7
        %v821 = vsub.s32 %v818, %v820
        %v822 = vrot.slane %v808, %v821
        %v823 = vcombine.high %v815, %v815
        %v824 = vcombine.high %v822, %v822
        %829 = vst.msk [vmem:[%s230 + $0x3] sm:$0x1] %vm472, %v815
        %830 = vst.msk [vmem:[%s230 + $0x13] sm:$0x1] %vm472, %v822
        %831 = vst.msk [vmem:[%s230 + $0x23] sm:$0x1] %vm472, %v823
        %832 = vst.msk [vmem:[%s230 + $0x33] sm:$0x1] %vm472, %v824
        %833 = vrot.lane.b32.xlu0 %v332, 64
        %v834 = vpop.permute.xlu0 %833
        %836 = vrot.lane.b32.xlu0 %v351, 80
        %v837 = vpop.permute.xlu0 %836
        %839 = vrot.lane.b32.xlu0 %v338, 96
        %v840 = vpop.permute.xlu0 %839
        %842 = vrot.lane.b32.xlu0 %v359, 112
        %v843 = vpop.permute.xlu0 %842
        %v845 = vsel %vm363, %v834, %v837
        %v846 = vsel %vm365, %v845, %v840
        %v847 = vsel %vm367, %v846, %v843
        %v849 = vsel %vm369, %v847, 0
        %851 = vmatprep.subr.mxu0 0.0
        %852 = vmatpush1.msra.mxu0 0.0
        %853 = vmatprep.subr.mxu0 0.0
        %854 = vmatpush1.msra.mxu0 0.0
        %855 = vmatprep.subr.mxu0 0.0
        %856 = vmatpush1.msra.mxu0 0.0
        %857 = vmatprep.subr.mxu0 0.0
        %858 = vmatpush1.msra.mxu0 0.0
        %859 = vmatprep.subr.mxu0 0.0
        %860 = vmatpush1.msra.mxu0 0.0
        %861 = vmatprep.subr.mxu0 0.0
        %862 = vmatpush1.msra.mxu0 0.0
        %863 = vmatprep.subr.mxu0 0.0
        %864 = vmatpush1.msra.mxu0 0.0
        %865 = vmatprep.subr.mxu0 0.0
        %866 = vmatpush1.msra.mxu0 0.0
        %867 = vmatprep.subr.mxu0 0.0
        %868 = vmatpush1.msra.mxu0 %v349
        %869 = vmatprep.subr.mxu0 0.0
        %870 = vmatpush1.msra.mxu0 %v348
        %871 = vmatprep.subr.mxu0 0.0
        %872 = vmatpush1.msra.mxu0 %v347
        %873 = vmatprep.subr.mxu0 0.0
        %874 = vmatpush1.msra.mxu0 %v346
        %875 = vmatprep.subr.mxu0 0.0
        %876 = vmatpush1.msra.mxu0 %v345
        %877 = vmatprep.subr.mxu0 0.0
        %878 = vmatpush1.msra.mxu0 %v344
        %879 = vmatprep.subr.mxu0 0.0
        %880 = vmatpush1.msra.mxu0 %v343
        %881 = vmatprep.subr.mxu0 0.0
        %882 = vmatpush1.msra.mxu0 %v342
        %883 = vmatprep.subr.mxu0 0.0
        %884 = vmatpush2.msra.mxu0 0.0
        %885 = vmatprep.subr.mxu0 0.0
        %886 = vmatpush2.msra.mxu0 0.0
        %887 = vmatprep.subr.mxu0 0.0
        %888 = vmatpush2.msra.mxu0 0.0
        %889 = vmatprep.subr.mxu0 0.0
        %890 = vmatpush2.msra.mxu0 0.0
        %891 = vmatprep.subr.mxu0 0.0
        %892 = vmatpush2.msra.mxu0 0.0
        %893 = vmatprep.subr.mxu0 0.0
        %894 = vmatpush2.msra.mxu0 0.0
        %895 = vmatprep.subr.mxu0 0.0
        %896 = vmatpush2.msra.mxu0 0.0
        %897 = vmatprep.subr.mxu0 0.0
        %898 = vmatpush2.msra.mxu0 0.0
        %899 = vmatprep.subr.mxu0 0.0
        %900 = vmatpush2.msra.mxu0 0.0
        %901 = vmatprep.subr.mxu0 0.0
        %902 = vmatpush2.msra.mxu0 0.0
        %903 = vmatprep.subr.mxu0 0.0
        %904 = vmatpush2.msra.mxu0 0.0
        %905 = vmatprep.subr.mxu0 0.0
        %906 = vmatpush2.msra.mxu0 0.0
        %907 = vmatprep.subr.mxu0 0.0
        %908 = vmatpush2.msra.mxu0 0.0
        %909 = vmatprep.subr.mxu0 0.0
        %910 = vmatpush2.msra.mxu0 0.0
        %911 = vmatprep.subr.mxu0 0.0
        %912 = vmatpush2.msra.mxu0 0.0
        %913 = vmatprep.subr.mxu0 0.0
        %914 = vmatpush2.msra.mxu0 0.0
        %915 = vmatprep.mubr.f32.mxu0 0.0
        %916 = vmatmul.mubr.f32.gmra.mxu0 %v849
        %v917 = vpop.f32.mrf.mxu0
        %v918 = vadd.f32 0.0, %v917
        %v919 = vpop.f32.mrf.mxu0
        %920 = vdwg.mxu0
        %v923 = vunpack.c.l.s4 1966171168
        %v924 = vunpack.c.0.s8 %v923
        %v925 = vlaneseq
        %v926 = vshrl.u32 %v925, 7
        %v927 = vsub.s32 %v924, %v926
        %v928 = vrot.slane %v918, %v927
        %v929 = vcombine.high %v928, %v928
        %v931 = vunpack.c.l.s4 1966171168
        %v932 = vunpack.c.0.s8 %v931
        %v933 = vlaneseq
        %v934 = vshrl.u32 %v933, 7
        %v935 = vsub.s32 %v932, %v934
        %v936 = vrot.slane %v928, %v935
        %v938 = vunpack.c.l.s4 1966171168
        %v939 = vunpack.c.0.s8 %v938
        %v940 = vlaneseq
        %v941 = vshrl.u32 %v940, 7
        %v942 = vsub.s32 %v939, %v941
        %v943 = vrot.slane %v929, %v942
        %v944 = vcombine.high %v936, %v936
        %v945 = vcombine.high %v943, %v943
        %950 = vst.msk [vmem:[%s230 + $0x4] sm:$0x1] %vm472, %v936
        %951 = vst.msk [vmem:[%s230 + $0x14] sm:$0x1] %vm472, %v943
        %952 = vst.msk [vmem:[%s230 + $0x24] sm:$0x1] %vm472, %v944
        %953 = vst.msk [vmem:[%s230 + $0x34] sm:$0x1] %vm472, %v945
        %954 = vrot.lane.b32.xlu0 %v332, 48
        %v955 = vpop.permute.xlu0 %954
        %957 = vrot.lane.b32.xlu0 %v351, 64
        %v958 = vpop.permute.xlu0 %957
        %960 = vrot.lane.b32.xlu0 %v338, 80
        %v961 = vpop.permute.xlu0 %960
        %963 = vrot.lane.b32.xlu0 %v359, 96
        %v964 = vpop.permute.xlu0 %963
        %v966 = vsel %vm363, %v955, %v958
        %v967 = vsel %vm365, %v966, %v961
        %v968 = vsel %vm367, %v967, %v964
        %v970 = vsel %vm369, %v968, 0
        %972 = vmatprep.subr.mxu0 0.0
        %973 = vmatpush1.msra.mxu0 0.0
        %974 = vmatprep.subr.mxu0 0.0
        %975 = vmatpush1.msra.mxu0 0.0
        %976 = vmatprep.subr.mxu0 0.0
        %977 = vmatpush1.msra.mxu0 0.0
        %978 = vmatprep.subr.mxu0 0.0
        %979 = vmatpush1.msra.mxu0 0.0
        %980 = vmatprep.subr.mxu0 0.0
        %981 = vmatpush1.msra.mxu0 0.0
        %982 = vmatprep.subr.mxu0 0.0
        %983 = vmatpush1.msra.mxu0 0.0
        %984 = vmatprep.subr.mxu0 0.0
        %985 = vmatpush1.msra.mxu0 0.0
        %986 = vmatprep.subr.mxu0 0.0
        %987 = vmatpush1.msra.mxu0 0.0
        %988 = vmatprep.subr.mxu0 0.0
        %989 = vmatpush1.msra.mxu0 %v349
        %990 = vmatprep.subr.mxu0 0.0
        %991 = vmatpush1.msra.mxu0 %v348
        %992 = vmatprep.subr.mxu0 0.0
        %993 = vmatpush1.msra.mxu0 %v347
        %994 = vmatprep.subr.mxu0 0.0
        %995 = vmatpush1.msra.mxu0 %v346
        %996 = vmatprep.subr.mxu0 0.0
        %997 = vmatpush1.msra.mxu0 %v345
        %998 = vmatprep.subr.mxu0 0.0
        %999 = vmatpush1.msra.mxu0 %v344
        %1000 = vmatprep.subr.mxu0 0.0
        %1001 = vmatpush1.msra.mxu0 %v343
        %1002 = vmatprep.subr.mxu0 0.0
        %1003 = vmatpush1.msra.mxu0 %v342
        %1004 = vmatprep.subr.mxu0 0.0
        %1005 = vmatpush2.msra.mxu0 0.0
        %1006 = vmatprep.subr.mxu0 0.0
        %1007 = vmatpush2.msra.mxu0 0.0
        %1008 = vmatprep.subr.mxu0 0.0
        %1009 = vmatpush2.msra.mxu0 0.0
        %1010 = vmatprep.subr.mxu0 0.0
        %1011 = vmatpush2.msra.mxu0 0.0
        %1012 = vmatprep.subr.mxu0 0.0
        %1013 = vmatpush2.msra.mxu0 0.0
        %1014 = vmatprep.subr.mxu0 0.0
        %1015 = vmatpush2.msra.mxu0 0.0
        %1016 = vmatprep.subr.mxu0 0.0
        %1017 = vmatpush2.msra.mxu0 0.0
        %1018 = vmatprep.subr.mxu0 0.0
        %1019 = vmatpush2.msra.mxu0 0.0
        %1020 = vmatprep.subr.mxu0 0.0
        %1021 = vmatpush2.msra.mxu0 0.0
        %1022 = vmatprep.subr.mxu0 0.0
        %1023 = vmatpush2.msra.mxu0 0.0
        %1024 = vmatprep.subr.mxu0 0.0
        %1025 = vmatpush2.msra.mxu0 0.0
        %1026 = vmatprep.subr.mxu0 0.0
        %1027 = vmatpush2.msra.mxu0 0.0
        %1028 = vmatprep.subr.mxu0 0.0
        %1029 = vmatpush2.msra.mxu0 0.0
        %1030 = vmatprep.subr.mxu0 0.0
        %1031 = vmatpush2.msra.mxu0 0.0
        %1032 = vmatprep.subr.mxu0 0.0
        %1033 = vmatpush2.msra.mxu0 0.0
        %1034 = vmatprep.subr.mxu0 0.0
        %1035 = vmatpush2.msra.mxu0 0.0
        %1036 = vmatprep.mubr.f32.mxu0 0.0
        %1037 = vmatmul.mubr.f32.gmra.mxu0 %v970
        %v1038 = vpop.f32.mrf.mxu0
        %v1039 = vadd.f32 0.0, %v1038
        %v1040 = vpop.f32.mrf.mxu0
        %1041 = vdwg.mxu0
        %v1044 = vunpack.c.l.s4 1966171168
        %v1045 = vunpack.c.0.s8 %v1044
        %v1046 = vlaneseq
        %v1047 = vshrl.u32 %v1046, 7
        %v1048 = vsub.s32 %v1045, %v1047
        %v1049 = vrot.slane %v1039, %v1048
        %v1050 = vcombine.high %v1049, %v1049
        %v1052 = vunpack.c.l.s4 1966171168
        %v1053 = vunpack.c.0.s8 %v1052
        %v1054 = vlaneseq
        %v1055 = vshrl.u32 %v1054, 7
        %v1056 = vsub.s32 %v1053, %v1055
        %v1057 = vrot.slane %v1049, %v1056
        %v1059 = vunpack.c.l.s4 1966171168
        %v1060 = vunpack.c.0.s8 %v1059
        %v1061 = vlaneseq
        %v1062 = vshrl.u32 %v1061, 7
        %v1063 = vsub.s32 %v1060, %v1062
        %v1064 = vrot.slane %v1050, %v1063
        %v1065 = vcombine.high %v1057, %v1057
        %v1066 = vcombine.high %v1064, %v1064
        %1071 = vst.msk [vmem:[%s230 + $0x5] sm:$0x1] %vm472, %v1057
        %1072 = vst.msk [vmem:[%s230 + $0x15] sm:$0x1] %vm472, %v1064
        %1073 = vst.msk [vmem:[%s230 + $0x25] sm:$0x1] %vm472, %v1065
        %1074 = vst.msk [vmem:[%s230 + $0x35] sm:$0x1] %vm472, %v1066
        %1075 = vrot.lane.b32.xlu0 %v332, 32
        %v1076 = vpop.permute.xlu0 %1075
        %1078 = vrot.lane.b32.xlu0 %v351, 48
        %v1079 = vpop.permute.xlu0 %1078
        %1081 = vrot.lane.b32.xlu0 %v338, 64
        %v1082 = vpop.permute.xlu0 %1081
        %1084 = vrot.lane.b32.xlu0 %v359, 80
        %v1085 = vpop.permute.xlu0 %1084
        %v1087 = vsel %vm363, %v1076, %v1079
        %v1088 = vsel %vm365, %v1087, %v1082
        %v1089 = vsel %vm367, %v1088, %v1085
        %v1091 = vsel %vm369, %v1089, 0
        %1093 = vmatprep.subr.mxu0 0.0
        %1094 = vmatpush1.msra.mxu0 0.0
        %1095 = vmatprep.subr.mxu0 0.0
        %1096 = vmatpush1.msra.mxu0 0.0
        %1097 = vmatprep.subr.mxu0 0.0
        %1098 = vmatpush1.msra.mxu0 0.0
        %1099 = vmatprep.subr.mxu0 0.0
        %1100 = vmatpush1.msra.mxu0 0.0
        %1101 = vmatprep.subr.mxu0 0.0
        %1102 = vmatpush1.msra.mxu0 0.0
        %1103 = vmatprep.subr.mxu0 0.0
        %1104 = vmatpush1.msra.mxu0 0.0
        %1105 = vmatprep.subr.mxu0 0.0
        %1106 = vmatpush1.msra.mxu0 0.0
        %1107 = vmatprep.subr.mxu0 0.0
        %1108 = vmatpush1.msra.mxu0 0.0
        %1109 = vmatprep.subr.mxu0 0.0
        %1110 = vmatpush1.msra.mxu0 %v349
        %1111 = vmatprep.subr.mxu0 0.0
        %1112 = vmatpush1.msra.mxu0 %v348
        %1113 = vmatprep.subr.mxu0 0.0
        %1114 = vmatpush1.msra.mxu0 %v347
        %1115 = vmatprep.subr.mxu0 0.0
        %1116 = vmatpush1.msra.mxu0 %v346
        %1117 = vmatprep.subr.mxu0 0.0
        %1118 = vmatpush1.msra.mxu0 %v345
        %1119 = vmatprep.subr.mxu0 0.0
        %1120 = vmatpush1.msra.mxu0 %v344
        %1121 = vmatprep.subr.mxu0 0.0
        %1122 = vmatpush1.msra.mxu0 %v343
        %1123 = vmatprep.subr.mxu0 0.0
        %1124 = vmatpush1.msra.mxu0 %v342
        %1125 = vmatprep.subr.mxu0 0.0
        %1126 = vmatpush2.msra.mxu0 0.0
        %1127 = vmatprep.subr.mxu0 0.0
        %1128 = vmatpush2.msra.mxu0 0.0
        %1129 = vmatprep.subr.mxu0 0.0
        %1130 = vmatpush2.msra.mxu0 0.0
        %1131 = vmatprep.subr.mxu0 0.0
        %1132 = vmatpush2.msra.mxu0 0.0
        %1133 = vmatprep.subr.mxu0 0.0
        %1134 = vmatpush2.msra.mxu0 0.0
        %1135 = vmatprep.subr.mxu0 0.0
        %1136 = vmatpush2.msra.mxu0 0.0
        %1137 = vmatprep.subr.mxu0 0.0
        %1138 = vmatpush2.msra.mxu0 0.0
        %1139 = vmatprep.subr.mxu0 0.0
        %1140 = vmatpush2.msra.mxu0 0.0
        %1141 = vmatprep.subr.mxu0 0.0
        %1142 = vmatpush2.msra.mxu0 0.0
        %1143 = vmatprep.subr.mxu0 0.0
        %1144 = vmatpush2.msra.mxu0 0.0
        %1145 = vmatprep.subr.mxu0 0.0
        %1146 = vmatpush2.msra.mxu0 0.0
        %1147 = vmatprep.subr.mxu0 0.0
        %1148 = vmatpush2.msra.mxu0 0.0
        %1149 = vmatprep.subr.mxu0 0.0
        %1150 = vmatpush2.msra.mxu0 0.0
        %1151 = vmatprep.subr.mxu0 0.0
        %1152 = vmatpush2.msra.mxu0 0.0
        %1153 = vmatprep.subr.mxu0 0.0
        %1154 = vmatpush2.msra.mxu0 0.0
        %1155 = vmatprep.subr.mxu0 0.0
        %1156 = vmatpush2.msra.mxu0 0.0
        %1157 = vmatprep.mubr.f32.mxu0 0.0
        %1158 = vmatmul.mubr.f32.gmra.mxu0 %v1091
        %v1159 = vpop.f32.mrf.mxu0
        %v1160 = vadd.f32 0.0, %v1159
        %v1161 = vpop.f32.mrf.mxu0
        %1162 = vdwg.mxu0
        %v1165 = vunpack.c.l.s4 1966171168
        %v1166 = vunpack.c.0.s8 %v1165
        %v1167 = vlaneseq
        %v1168 = vshrl.u32 %v1167, 7
        %v1169 = vsub.s32 %v1166, %v1168
        %v1170 = vrot.slane %v1160, %v1169
        %v1171 = vcombine.high %v1170, %v1170
        %v1173 = vunpack.c.l.s4 1966171168
        %v1174 = vunpack.c.0.s8 %v1173
        %v1175 = vlaneseq
        %v1176 = vshrl.u32 %v1175, 7
        %v1177 = vsub.s32 %v1174, %v1176
        %v1178 = vrot.slane %v1170, %v1177
        %v1180 = vunpack.c.l.s4 1966171168
        %v1181 = vunpack.c.0.s8 %v1180
        %v1182 = vlaneseq
        %v1183 = vshrl.u32 %v1182, 7
        %v1184 = vsub.s32 %v1181, %v1183
        %v1185 = vrot.slane %v1171, %v1184
        %v1186 = vcombine.high %v1178, %v1178
        %v1187 = vcombine.high %v1185, %v1185
        %1192 = vst.msk [vmem:[%s230 + $0x6] sm:$0x1] %vm472, %v1178
        %1193 = vst.msk [vmem:[%s230 + $0x16] sm:$0x1] %vm472, %v1185
        %1194 = vst.msk [vmem:[%s230 + $0x26] sm:$0x1] %vm472, %v1186
        %1195 = vst.msk [vmem:[%s230 + $0x36] sm:$0x1] %vm472, %v1187
        %1196 = vrot.lane.b32.xlu0 %v332, 16
        %v1197 = vpop.permute.xlu0 %1196
        %1199 = vrot.lane.b32.xlu0 %v351, 32
        %v1200 = vpop.permute.xlu0 %1199
        %1202 = vrot.lane.b32.xlu0 %v338, 48
        %v1203 = vpop.permute.xlu0 %1202
        %1205 = vrot.lane.b32.xlu0 %v359, 64
        %v1206 = vpop.permute.xlu0 %1205
        %v1208 = vsel %vm363, %v1197, %v1200
        %v1209 = vsel %vm365, %v1208, %v1203
        %v1210 = vsel %vm367, %v1209, %v1206
        %v1212 = vsel %vm369, %v1210, 0
        %1214 = vmatprep.subr.mxu0 0.0
        %1215 = vmatpush1.msra.mxu0 0.0
        %1216 = vmatprep.subr.mxu0 0.0
        %1217 = vmatpush1.msra.mxu0 0.0
        %1218 = vmatprep.subr.mxu0 0.0
        %1219 = vmatpush1.msra.mxu0 0.0
        %1220 = vmatprep.subr.mxu0 0.0
        %1221 = vmatpush1.msra.mxu0 0.0
        %1222 = vmatprep.subr.mxu0 0.0
        %1223 = vmatpush1.msra.mxu0 0.0
        %1224 = vmatprep.subr.mxu0 0.0
        %1225 = vmatpush1.msra.mxu0 0.0
        %1226 = vmatprep.subr.mxu0 0.0
        %1227 = vmatpush1.msra.mxu0 0.0
        %1228 = vmatprep.subr.mxu0 0.0
        %1229 = vmatpush1.msra.mxu0 0.0
        %1230 = vmatprep.subr.mxu0 0.0
        %1231 = vmatpush1.msra.mxu0 %v349
        %1232 = vmatprep.subr.mxu0 0.0
        %1233 = vmatpush1.msra.mxu0 %v348
        %1234 = vmatprep.subr.mxu0 0.0
        %1235 = vmatpush1.msra.mxu0 %v347
        %1236 = vmatprep.subr.mxu0 0.0
        %1237 = vmatpush1.msra.mxu0 %v346
        %1238 = vmatprep.subr.mxu0 0.0
        %1239 = vmatpush1.msra.mxu0 %v345
        %1240 = vmatprep.subr.mxu0 0.0
        %1241 = vmatpush1.msra.mxu0 %v344
        %1242 = vmatprep.subr.mxu0 0.0
        %1243 = vmatpush1.msra.mxu0 %v343
        %1244 = vmatprep.subr.mxu0 0.0
        %1245 = vmatpush1.msra.mxu0 %v342
        %1246 = vmatprep.subr.mxu0 0.0
        %1247 = vmatpush2.msra.mxu0 0.0
        %1248 = vmatprep.subr.mxu0 0.0
        %1249 = vmatpush2.msra.mxu0 0.0
        %1250 = vmatprep.subr.mxu0 0.0
        %1251 = vmatpush2.msra.mxu0 0.0
        %1252 = vmatprep.subr.mxu0 0.0
        %1253 = vmatpush2.msra.mxu0 0.0
        %1254 = vmatprep.subr.mxu0 0.0
        %1255 = vmatpush2.msra.mxu0 0.0
        %1256 = vmatprep.subr.mxu0 0.0
        %1257 = vmatpush2.msra.mxu0 0.0
        %1258 = vmatprep.subr.mxu0 0.0
        %1259 = vmatpush2.msra.mxu0 0.0
        %1260 = vmatprep.subr.mxu0 0.0
        %1261 = vmatpush2.msra.mxu0 0.0
        %1262 = vmatprep.subr.mxu0 0.0
        %1263 = vmatpush2.msra.mxu0 0.0
        %1264 = vmatprep.subr.mxu0 0.0
        %1265 = vmatpush2.msra.mxu0 0.0
        %1266 = vmatprep.subr.mxu0 0.0
        %1267 = vmatpush2.msra.mxu0 0.0
        %1268 = vmatprep.subr.mxu0 0.0
        %1269 = vmatpush2.msra.mxu0 0.0
        %1270 = vmatprep.subr.mxu0 0.0
        %1271 = vmatpush2.msra.mxu0 0.0
        %1272 = vmatprep.subr.mxu0 0.0
        %1273 = vmatpush2.msra.mxu0 0.0
        %1274 = vmatprep.subr.mxu0 0.0
        %1275 = vmatpush2.msra.mxu0 0.0
        %1276 = vmatprep.subr.mxu0 0.0
        %1277 = vmatpush2.msra.mxu0 0.0
        %1278 = vmatprep.mubr.f32.mxu0 0.0
        %1279 = vmatmul.mubr.f32.gmra.mxu0 %v1212
        %v1280 = vpop.f32.mrf.mxu0
        %v1281 = vadd.f32 0.0, %v1280
        %v1282 = vpop.f32.mrf.mxu0
        %1283 = vdwg.mxu0
        %v1286 = vunpack.c.l.s4 1966171168
        %v1287 = vunpack.c.0.s8 %v1286
        %v1288 = vlaneseq
        %v1289 = vshrl.u32 %v1288, 7
        %v1290 = vsub.s32 %v1287, %v1289
        %v1291 = vrot.slane %v1281, %v1290
        %v1292 = vcombine.high %v1291, %v1291
        %v1294 = vunpack.c.l.s4 1966171168
        %v1295 = vunpack.c.0.s8 %v1294
        %v1296 = vlaneseq
        %v1297 = vshrl.u32 %v1296, 7
        %v1298 = vsub.s32 %v1295, %v1297
        %v1299 = vrot.slane %v1291, %v1298
        %v1301 = vunpack.c.l.s4 1966171168
        %v1302 = vunpack.c.0.s8 %v1301
        %v1303 = vlaneseq
        %v1304 = vshrl.u32 %v1303, 7
        %v1305 = vsub.s32 %v1302, %v1304
        %v1306 = vrot.slane %v1292, %v1305
        %v1307 = vcombine.high %v1299, %v1299
        %v1308 = vcombine.high %v1306, %v1306
        %1313 = vst.msk [vmem:[%s230 + $0x7] sm:$0x1] %vm472, %v1299
        %1314 = vst.msk [vmem:[%s230 + $0x17] sm:$0x1] %vm472, %v1306
        %1315 = vst.msk [vmem:[%s230 + $0x27] sm:$0x1] %vm472, %v1307
        %1316 = vst.msk [vmem:[%s230 + $0x37] sm:$0x1] %vm472, %v1308
        %v1318 = vrot.slane %v334, 4
        %1319 = vrot.lane.b32.xlu0 %v1318, 16
        %v1320 = vpop.permute.xlu0 %1319
        %1323 = vrot.lane.b32.xlu0 %v340, 32
        %v1324 = vpop.permute.xlu0 %1323
        %v1326 = vrot.slane %v340, 4
        %1327 = vrot.lane.b32.xlu0 %v1326, 48
        %v1328 = vpop.permute.xlu0 %1327
        %v1330 = vsel %vm363, %v334, %v1320
        %v1331 = vsel %vm365, %v1330, %v1324
        %v1332 = vsel %vm367, %v1331, %v1328
        %v1334 = vsel %vm369, %v1332, 0
        %1336 = vmatprep.subr.mxu0 0.0
        %1337 = vmatpush1.msra.mxu0 0.0
        %1338 = vmatprep.subr.mxu0 0.0
        %1339 = vmatpush1.msra.mxu0 0.0
        %1340 = vmatprep.subr.mxu0 0.0
        %1341 = vmatpush1.msra.mxu0 0.0
        %1342 = vmatprep.subr.mxu0 0.0
        %1343 = vmatpush1.msra.mxu0 0.0
        %1344 = vmatprep.subr.mxu0 0.0
        %1345 = vmatpush1.msra.mxu0 0.0
        %1346 = vmatprep.subr.mxu0 0.0
        %1347 = vmatpush1.msra.mxu0 0.0
        %1348 = vmatprep.subr.mxu0 0.0
        %1349 = vmatpush1.msra.mxu0 0.0
        %1350 = vmatprep.subr.mxu0 0.0
        %1351 = vmatpush1.msra.mxu0 0.0
        %1352 = vmatprep.subr.mxu0 0.0
        %1353 = vmatpush1.msra.mxu0 %v349
        %1354 = vmatprep.subr.mxu0 0.0
        %1355 = vmatpush1.msra.mxu0 %v348
        %1356 = vmatprep.subr.mxu0 0.0
        %1357 = vmatpush1.msra.mxu0 %v347
        %1358 = vmatprep.subr.mxu0 0.0
        %1359 = vmatpush1.msra.mxu0 %v346
        %1360 = vmatprep.subr.mxu0 0.0
        %1361 = vmatpush1.msra.mxu0 %v345
        %1362 = vmatprep.subr.mxu0 0.0
        %1363 = vmatpush1.msra.mxu0 %v344
        %1364 = vmatprep.subr.mxu0 0.0
        %1365 = vmatpush1.msra.mxu0 %v343
        %1366 = vmatprep.subr.mxu0 0.0
        %1367 = vmatpush1.msra.mxu0 %v342
        %1368 = vmatprep.subr.mxu0 0.0
        %1369 = vmatpush2.msra.mxu0 0.0
        %1370 = vmatprep.subr.mxu0 0.0
        %1371 = vmatpush2.msra.mxu0 0.0
        %1372 = vmatprep.subr.mxu0 0.0
        %1373 = vmatpush2.msra.mxu0 0.0
        %1374 = vmatprep.subr.mxu0 0.0
        %1375 = vmatpush2.msra.mxu0 0.0
        %1376 = vmatprep.subr.mxu0 0.0
        %1377 = vmatpush2.msra.mxu0 0.0
        %1378 = vmatprep.subr.mxu0 0.0
        %1379 = vmatpush2.msra.mxu0 0.0
        %1380 = vmatprep.subr.mxu0 0.0
        %1381 = vmatpush2.msra.mxu0 0.0
        %1382 = vmatprep.subr.mxu0 0.0
        %1383 = vmatpush2.msra.mxu0 0.0
        %1384 = vmatprep.subr.mxu0 0.0
        %1385 = vmatpush2.msra.mxu0 0.0
        %1386 = vmatprep.subr.mxu0 0.0
        %1387 = vmatpush2.msra.mxu0 0.0
        %1388 = vmatprep.subr.mxu0 0.0
        %1389 = vmatpush2.msra.mxu0 0.0
        %1390 = vmatprep.subr.mxu0 0.0
        %1391 = vmatpush2.msra.mxu0 0.0
        %1392 = vmatprep.subr.mxu0 0.0
        %1393 = vmatpush2.msra.mxu0 0.0
        %1394 = vmatprep.subr.mxu0 0.0
        %1395 = vmatpush2.msra.mxu0 0.0
        %1396 = vmatprep.subr.mxu0 0.0
        %1397 = vmatpush2.msra.mxu0 0.0
        %1398 = vmatprep.subr.mxu0 0.0
        %1399 = vmatpush2.msra.mxu0 0.0
        %1400 = vmatprep.mubr.f32.mxu0 0.0
        %1401 = vmatmul.mubr.f32.gmra.mxu0 %v1334
        %v1402 = vpop.f32.mrf.mxu0
        %v1403 = vadd.f32 0.0, %v1402
        %v1404 = vpop.f32.mrf.mxu0
        %1405 = vdwg.mxu0
        %v1408 = vunpack.c.l.s4 1966171168
        %v1409 = vunpack.c.0.s8 %v1408
        %v1410 = vlaneseq
        %v1411 = vshrl.u32 %v1410, 7
        %v1412 = vsub.s32 %v1409, %v1411
        %v1413 = vrot.slane %v1403, %v1412
        %v1414 = vcombine.high %v1413, %v1413
        %v1416 = vunpack.c.l.s4 1966171168
        %v1417 = vunpack.c.0.s8 %v1416
        %v1418 = vlaneseq
        %v1419 = vshrl.u32 %v1418, 7
        %v1420 = vsub.s32 %v1417, %v1419
        %v1421 = vrot.slane %v1413, %v1420
        %v1423 = vunpack.c.l.s4 1966171168
        %v1424 = vunpack.c.0.s8 %v1423
        %v1425 = vlaneseq
        %v1426 = vshrl.u32 %v1425, 7
        %v1427 = vsub.s32 %v1424, %v1426
        %v1428 = vrot.slane %v1414, %v1427
        %v1429 = vcombine.high %v1421, %v1421
        %v1430 = vcombine.high %v1428, %v1428
        %1435 = vst.msk [vmem:[%s230 + $0x8] sm:$0x1] %vm472, %v1421
        %1436 = vst.msk [vmem:[%s230 + $0x18] sm:$0x1] %vm472, %v1428
        %1437 = vst.msk [vmem:[%s230 + $0x28] sm:$0x1] %vm472, %v1429
        %1438 = vst.msk [vmem:[%s230 + $0x38] sm:$0x1] %vm472, %v1430
        %1439 = vrot.lane.b32.xlu0 %v334, 112
        %v1440 = vpop.permute.xlu0 %1439
        %1443 = vrot.lane.b32.xlu0 %v340, 16
        %v1444 = vpop.permute.xlu0 %1443
        %1446 = vrot.lane.b32.xlu0 %v1326, 32
        %v1447 = vpop.permute.xlu0 %1446
        %v1449 = vsel %vm363, %v1440, %v1318
        %v1450 = vsel %vm365, %v1449, %v1444
        %v1451 = vsel %vm367, %v1450, %v1447
        %v1453 = vsel %vm369, %v1451, 0
        %1455 = vmatprep.subr.mxu0 0.0
        %1456 = vmatpush1.msra.mxu0 0.0
        %1457 = vmatprep.subr.mxu0 0.0
        %1458 = vmatpush1.msra.mxu0 0.0
        %1459 = vmatprep.subr.mxu0 0.0
        %1460 = vmatpush1.msra.mxu0 0.0
        %1461 = vmatprep.subr.mxu0 0.0
        %1462 = vmatpush1.msra.mxu0 0.0
        %1463 = vmatprep.subr.mxu0 0.0
        %1464 = vmatpush1.msra.mxu0 0.0
        %1465 = vmatprep.subr.mxu0 0.0
        %1466 = vmatpush1.msra.mxu0 0.0
        %1467 = vmatprep.subr.mxu0 0.0
        %1468 = vmatpush1.msra.mxu0 0.0
        %1469 = vmatprep.subr.mxu0 0.0
        %1470 = vmatpush1.msra.mxu0 0.0
        %1471 = vmatprep.subr.mxu0 0.0
        %1472 = vmatpush1.msra.mxu0 %v349
        %1473 = vmatprep.subr.mxu0 0.0
        %1474 = vmatpush1.msra.mxu0 %v348
        %1475 = vmatprep.subr.mxu0 0.0
        %1476 = vmatpush1.msra.mxu0 %v347
        %1477 = vmatprep.subr.mxu0 0.0
        %1478 = vmatpush1.msra.mxu0 %v346
        %1479 = vmatprep.subr.mxu0 0.0
        %1480 = vmatpush1.msra.mxu0 %v345
        %1481 = vmatprep.subr.mxu0 0.0
        %1482 = vmatpush1.msra.mxu0 %v344
        %1483 = vmatprep.subr.mxu0 0.0
        %1484 = vmatpush1.msra.mxu0 %v343
        %1485 = vmatprep.subr.mxu0 0.0
        %1486 = vmatpush1.msra.mxu0 %v342
        %1487 = vmatprep.subr.mxu0 0.0
        %1488 = vmatpush2.msra.mxu0 0.0
        %1489 = vmatprep.subr.mxu0 0.0
        %1490 = vmatpush2.msra.mxu0 0.0
        %1491 = vmatprep.subr.mxu0 0.0
        %1492 = vmatpush2.msra.mxu0 0.0
        %1493 = vmatprep.subr.mxu0 0.0
        %1494 = vmatpush2.msra.mxu0 0.0
        %1495 = vmatprep.subr.mxu0 0.0
        %1496 = vmatpush2.msra.mxu0 0.0
        %1497 = vmatprep.subr.mxu0 0.0
        %1498 = vmatpush2.msra.mxu0 0.0
        %1499 = vmatprep.subr.mxu0 0.0
        %1500 = vmatpush2.msra.mxu0 0.0
        %1501 = vmatprep.subr.mxu0 0.0
        %1502 = vmatpush2.msra.mxu0 0.0
        %1503 = vmatprep.subr.mxu0 0.0
        %1504 = vmatpush2.msra.mxu0 0.0
        %1505 = vmatprep.subr.mxu0 0.0
        %1506 = vmatpush2.msra.mxu0 0.0
        %1507 = vmatprep.subr.mxu0 0.0
        %1508 = vmatpush2.msra.mxu0 0.0
        %1509 = vmatprep.subr.mxu0 0.0
        %1510 = vmatpush2.msra.mxu0 0.0
        %1511 = vmatprep.subr.mxu0 0.0
        %1512 = vmatpush2.msra.mxu0 0.0
        %1513 = vmatprep.subr.mxu0 0.0
        %1514 = vmatpush2.msra.mxu0 0.0
        %1515 = vmatprep.subr.mxu0 0.0
        %1516 = vmatpush2.msra.mxu0 0.0
        %1517 = vmatprep.subr.mxu0 0.0
        %1518 = vmatpush2.msra.mxu0 0.0
        %1519 = vmatprep.mubr.f32.mxu0 0.0
        %1520 = vmatmul.mubr.f32.gmra.mxu0 %v1453
        %v1521 = vpop.f32.mrf.mxu0
        %v1522 = vadd.f32 0.0, %v1521
        %v1523 = vpop.f32.mrf.mxu0
        %1524 = vdwg.mxu0
        %v1527 = vunpack.c.l.s4 1966171168
        %v1528 = vunpack.c.0.s8 %v1527
        %v1529 = vlaneseq
        %v1530 = vshrl.u32 %v1529, 7
        %v1531 = vsub.s32 %v1528, %v1530
        %v1532 = vrot.slane %v1522, %v1531
        %v1533 = vcombine.high %v1532, %v1532
        %v1535 = vunpack.c.l.s4 1966171168
        %v1536 = vunpack.c.0.s8 %v1535
        %v1537 = vlaneseq
        %v1538 = vshrl.u32 %v1537, 7
        %v1539 = vsub.s32 %v1536, %v1538
        %v1540 = vrot.slane %v1532, %v1539
        %v1542 = vunpack.c.l.s4 1966171168
        %v1543 = vunpack.c.0.s8 %v1542
        %v1544 = vlaneseq
        %v1545 = vshrl.u32 %v1544, 7
        %v1546 = vsub.s32 %v1543, %v1545
        %v1547 = vrot.slane %v1533, %v1546
        %v1548 = vcombine.high %v1540, %v1540
        %v1549 = vcombine.high %v1547, %v1547
        %1554 = vst.msk [vmem:[%s230 + $0x9] sm:$0x1] %vm472, %v1540
        %1555 = vst.msk [vmem:[%s230 + $0x19] sm:$0x1] %vm472, %v1547
        %1556 = vst.msk [vmem:[%s230 + $0x29] sm:$0x1] %vm472, %v1548
        %1557 = vst.msk [vmem:[%s230 + $0x39] sm:$0x1] %vm472, %v1549
        %1558 = vrot.lane.b32.xlu0 %v334, 96
        %v1559 = vpop.permute.xlu0 %1558
        %1561 = vrot.lane.b32.xlu0 %v1318, 112
        %v1562 = vpop.permute.xlu0 %1561
        %1564 = vrot.lane.b32.xlu0 %v1326, 16
        %v1565 = vpop.permute.xlu0 %1564
        %v1567 = vsel %vm363, %v1559, %v1562
        %v1568 = vsel %vm365, %v1567, %v340
        %v1569 = vsel %vm367, %v1568, %v1565
        %v1571 = vsel %vm369, %v1569, 0
        %1573 = vmatprep.subr.mxu0 0.0
        %1574 = vmatpush1.msra.mxu0 0.0
        %1575 = vmatprep.subr.mxu0 0.0
        %1576 = vmatpush1.msra.mxu0 0.0
        %1577 = vmatprep.subr.mxu0 0.0
        %1578 = vmatpush1.msra.mxu0 0.0
        %1579 = vmatprep.subr.mxu0 0.0
        %1580 = vmatpush1.msra.mxu0 0.0
        %1581 = vmatprep.subr.mxu0 0.0
        %1582 = vmatpush1.msra.mxu0 0.0
        %1583 = vmatprep.subr.mxu0 0.0
        %1584 = vmatpush1.msra.mxu0 0.0
        %1585 = vmatprep.subr.mxu0 0.0
        %1586 = vmatpush1.msra.mxu0 0.0
        %1587 = vmatprep.subr.mxu0 0.0
        %1588 = vmatpush1.msra.mxu0 0.0
        %1589 = vmatprep.subr.mxu0 0.0
        %1590 = vmatpush1.msra.mxu0 %v349
        %1591 = vmatprep.subr.mxu0 0.0
        %1592 = vmatpush1.msra.mxu0 %v348
        %1593 = vmatprep.subr.mxu0 0.0
        %1594 = vmatpush1.msra.mxu0 %v347
        %1595 = vmatprep.subr.mxu0 0.0
        %1596 = vmatpush1.msra.mxu0 %v346
        %1597 = vmatprep.subr.mxu0 0.0
        %1598 = vmatpush1.msra.mxu0 %v345
        %1599 = vmatprep.subr.mxu0 0.0
        %1600 = vmatpush1.msra.mxu0 %v344
        %1601 = vmatprep.subr.mxu0 0.0
        %1602 = vmatpush1.msra.mxu0 %v343
        %1603 = vmatprep.subr.mxu0 0.0
        %1604 = vmatpush1.msra.mxu0 %v342
        %1605 = vmatprep.subr.mxu0 0.0
        %1606 = vmatpush2.msra.mxu0 0.0
        %1607 = vmatprep.subr.mxu0 0.0
        %1608 = vmatpush2.msra.mxu0 0.0
        %1609 = vmatprep.subr.mxu0 0.0
        %1610 = vmatpush2.msra.mxu0 0.0
        %1611 = vmatprep.subr.mxu0 0.0
        %1612 = vmatpush2.msra.mxu0 0.0
        %1613 = vmatprep.subr.mxu0 0.0
        %1614 = vmatpush2.msra.mxu0 0.0
        %1615 = vmatprep.subr.mxu0 0.0
        %1616 = vmatpush2.msra.mxu0 0.0
        %1617 = vmatprep.subr.mxu0 0.0
        %1618 = vmatpush2.msra.mxu0 0.0
        %1619 = vmatprep.subr.mxu0 0.0
        %1620 = vmatpush2.msra.mxu0 0.0
        %1621 = vmatprep.subr.mxu0 0.0
        %1622 = vmatpush2.msra.mxu0 0.0
        %1623 = vmatprep.subr.mxu0 0.0
        %1624 = vmatpush2.msra.mxu0 0.0
        %1625 = vmatprep.subr.mxu0 0.0
        %1626 = vmatpush2.msra.mxu0 0.0
        %1627 = vmatprep.subr.mxu0 0.0
        %1628 = vmatpush2.msra.mxu0 0.0
        %1629 = vmatprep.subr.mxu0 0.0
        %1630 = vmatpush2.msra.mxu0 0.0
        %1631 = vmatprep.subr.mxu0 0.0
        %1632 = vmatpush2.msra.mxu0 0.0
        %1633 = vmatprep.subr.mxu0 0.0
        %1634 = vmatpush2.msra.mxu0 0.0
        %1635 = vmatprep.subr.mxu0 0.0
        %1636 = vmatpush2.msra.mxu0 0.0
        %1637 = vmatprep.mubr.f32.mxu0 0.0
        %1638 = vmatmul.mubr.f32.gmra.mxu0 %v1571
        %v1639 = vpop.f32.mrf.mxu0
        %v1640 = vadd.f32 0.0, %v1639
        %v1641 = vpop.f32.mrf.mxu0
        %1642 = vdwg.mxu0
        %v1645 = vunpack.c.l.s4 1966171168
        %v1646 = vunpack.c.0.s8 %v1645
        %v1647 = vlaneseq
        %v1648 = vshrl.u32 %v1647, 7
        %v1649 = vsub.s32 %v1646, %v1648
        %v1650 = vrot.slane %v1640, %v1649
        %v1651 = vcombine.high %v1650, %v1650
        %v1653 = vunpack.c.l.s4 1966171168
        %v1654 = vunpack.c.0.s8 %v1653
        %v1655 = vlaneseq
        %v1656 = vshrl.u32 %v1655, 7
        %v1657 = vsub.s32 %v1654, %v1656
        %v1658 = vrot.slane %v1650, %v1657
        %v1660 = vunpack.c.l.s4 1966171168
        %v1661 = vunpack.c.0.s8 %v1660
        %v1662 = vlaneseq
        %v1663 = vshrl.u32 %v1662, 7
        %v1664 = vsub.s32 %v1661, %v1663
        %v1665 = vrot.slane %v1651, %v1664
        %v1666 = vcombine.high %v1658, %v1658
        %v1667 = vcombine.high %v1665, %v1665
        %1672 = vst.msk [vmem:[%s230 + $0xa] sm:$0x1] %vm472, %v1658
        %1673 = vst.msk [vmem:[%s230 + $0x1a] sm:$0x1] %vm472, %v1665
        %1674 = vst.msk [vmem:[%s230 + $0x2a] sm:$0x1] %vm472, %v1666
        %1675 = vst.msk [vmem:[%s230 + $0x3a] sm:$0x1] %vm472, %v1667
        %1676 = vrot.lane.b32.xlu0 %v334, 80
        %v1677 = vpop.permute.xlu0 %1676
        %1679 = vrot.lane.b32.xlu0 %v1318, 96
        %v1680 = vpop.permute.xlu0 %1679
        %1682 = vrot.lane.b32.xlu0 %v340, 112
        %v1683 = vpop.permute.xlu0 %1682
        %v1686 = vsel %vm363, %v1677, %v1680
        %v1687 = vsel %vm365, %v1686, %v1683
        %v1688 = vsel %vm367, %v1687, %v1326
        %v1690 = vsel %vm369, %v1688, 0
        %1692 = vmatprep.subr.mxu0 0.0
        %1693 = vmatpush1.msra.mxu0 0.0
        %1694 = vmatprep.subr.mxu0 0.0
        %1695 = vmatpush1.msra.mxu0 0.0
        %1696 = vmatprep.subr.mxu0 0.0
        %1697 = vmatpush1.msra.mxu0 0.0
        %1698 = vmatprep.subr.mxu0 0.0
        %1699 = vmatpush1.msra.mxu0 0.0
        %1700 = vmatprep.subr.mxu0 0.0
        %1701 = vmatpush1.msra.mxu0 0.0
        %1702 = vmatprep.subr.mxu0 0.0
        %1703 = vmatpush1.msra.mxu0 0.0
        %1704 = vmatprep.subr.mxu0 0.0
        %1705 = vmatpush1.msra.mxu0 0.0
        %1706 = vmatprep.subr.mxu0 0.0
        %1707 = vmatpush1.msra.mxu0 0.0
        %1708 = vmatprep.subr.mxu0 0.0
        %1709 = vmatpush1.msra.mxu0 %v349
        %1710 = vmatprep.subr.mxu0 0.0
        %1711 = vmatpush1.msra.mxu0 %v348
        %1712 = vmatprep.subr.mxu0 0.0
        %1713 = vmatpush1.msra.mxu0 %v347
        %1714 = vmatprep.subr.mxu0 0.0
        %1715 = vmatpush1.msra.mxu0 %v346
        %1716 = vmatprep.subr.mxu0 0.0
        %1717 = vmatpush1.msra.mxu0 %v345
        %1718 = vmatprep.subr.mxu0 0.0
        %1719 = vmatpush1.msra.mxu0 %v344
        %1720 = vmatprep.subr.mxu0 0.0
        %1721 = vmatpush1.msra.mxu0 %v343
        %1722 = vmatprep.subr.mxu0 0.0
        %1723 = vmatpush1.msra.mxu0 %v342
        %1724 = vmatprep.subr.mxu0 0.0
        %1725 = vmatpush2.msra.mxu0 0.0
        %1726 = vmatprep.subr.mxu0 0.0
        %1727 = vmatpush2.msra.mxu0 0.0
        %1728 = vmatprep.subr.mxu0 0.0
        %1729 = vmatpush2.msra.mxu0 0.0
        %1730 = vmatprep.subr.mxu0 0.0
        %1731 = vmatpush2.msra.mxu0 0.0
        %1732 = vmatprep.subr.mxu0 0.0
        %1733 = vmatpush2.msra.mxu0 0.0
        %1734 = vmatprep.subr.mxu0 0.0
        %1735 = vmatpush2.msra.mxu0 0.0
        %1736 = vmatprep.subr.mxu0 0.0
        %1737 = vmatpush2.msra.mxu0 0.0
        %1738 = vmatprep.subr.mxu0 0.0
        %1739 = vmatpush2.msra.mxu0 0.0
        %1740 = vmatprep.subr.mxu0 0.0
        %1741 = vmatpush2.msra.mxu0 0.0
        %1742 = vmatprep.subr.mxu0 0.0
        %1743 = vmatpush2.msra.mxu0 0.0
        %1744 = vmatprep.subr.mxu0 0.0
        %1745 = vmatpush2.msra.mxu0 0.0
        %1746 = vmatprep.subr.mxu0 0.0
        %1747 = vmatpush2.msra.mxu0 0.0
        %1748 = vmatprep.subr.mxu0 0.0
        %1749 = vmatpush2.msra.mxu0 0.0
        %1750 = vmatprep.subr.mxu0 0.0
        %1751 = vmatpush2.msra.mxu0 0.0
        %1752 = vmatprep.subr.mxu0 0.0
        %1753 = vmatpush2.msra.mxu0 0.0
        %1754 = vmatprep.subr.mxu0 0.0
        %1755 = vmatpush2.msra.mxu0 0.0
        %1756 = vmatprep.mubr.f32.mxu0 0.0
        %1757 = vmatmul.mubr.f32.gmra.mxu0 %v1690
        %v1758 = vpop.f32.mrf.mxu0
        %v1759 = vadd.f32 0.0, %v1758
        %v1760 = vpop.f32.mrf.mxu0
        %1761 = vdwg.mxu0
        %v1764 = vunpack.c.l.s4 1966171168
        %v1765 = vunpack.c.0.s8 %v1764
        %v1766 = vlaneseq
        %v1767 = vshrl.u32 %v1766, 7
        %v1768 = vsub.s32 %v1765, %v1767
        %v1769 = vrot.slane %v1759, %v1768
        %v1770 = vcombine.high %v1769, %v1769
        %v1772 = vunpack.c.l.s4 1966171168
        %v1773 = vunpack.c.0.s8 %v1772
        %v1774 = vlaneseq
        %v1775 = vshrl.u32 %v1774, 7
        %v1776 = vsub.s32 %v1773, %v1775
        %v1777 = vrot.slane %v1769, %v1776
        %v1779 = vunpack.c.l.s4 1966171168
        %v1780 = vunpack.c.0.s8 %v1779
        %v1781 = vlaneseq
        %v1782 = vshrl.u32 %v1781, 7
        %v1783 = vsub.s32 %v1780, %v1782
        %v1784 = vrot.slane %v1770, %v1783
        %v1785 = vcombine.high %v1777, %v1777
        %v1786 = vcombine.high %v1784, %v1784
        %1791 = vst.msk [vmem:[%s230 + $0xb] sm:$0x1] %vm472, %v1777
        %1792 = vst.msk [vmem:[%s230 + $0x1b] sm:$0x1] %vm472, %v1784
        %1793 = vst.msk [vmem:[%s230 + $0x2b] sm:$0x1] %vm472, %v1785
        %1794 = vst.msk [vmem:[%s230 + $0x3b] sm:$0x1] %vm472, %v1786
        %1795 = vrot.lane.b32.xlu0 %v334, 64
        %v1796 = vpop.permute.xlu0 %1795
        %1798 = vrot.lane.b32.xlu0 %v1318, 80
        %v1799 = vpop.permute.xlu0 %1798
        %1801 = vrot.lane.b32.xlu0 %v340, 96
        %v1802 = vpop.permute.xlu0 %1801
        %1804 = vrot.lane.b32.xlu0 %v1326, 112
        %v1805 = vpop.permute.xlu0 %1804
        %v1807 = vsel %vm363, %v1796, %v1799
        %v1808 = vsel %vm365, %v1807, %v1802
        %v1809 = vsel %vm367, %v1808, %v1805
        %v1811 = vsel %vm369, %v1809, 0
        %1813 = vmatprep.subr.mxu0 0.0
        %1814 = vmatpush1.msra.mxu0 0.0
        %1815 = vmatprep.subr.mxu0 0.0
        %1816 = vmatpush1.msra.mxu0 0.0
        %1817 = vmatprep.subr.mxu0 0.0
        %1818 = vmatpush1.msra.mxu0 0.0
        %1819 = vmatprep.subr.mxu0 0.0
        %1820 = vmatpush1.msra.mxu0 0.0
        %1821 = vmatprep.subr.mxu0 0.0
        %1822 = vmatpush1.msra.mxu0 0.0
        %1823 = vmatprep.subr.mxu0 0.0
        %1824 = vmatpush1.msra.mxu0 0.0
        %1825 = vmatprep.subr.mxu0 0.0
        %1826 = vmatpush1.msra.mxu0 0.0
        %1827 = vmatprep.subr.mxu0 0.0
        %1828 = vmatpush1.msra.mxu0 0.0
        %1829 = vmatprep.subr.mxu0 0.0
        %1830 = vmatpush1.msra.mxu0 %v349
        %1831 = vmatprep.subr.mxu0 0.0
        %1832 = vmatpush1.msra.mxu0 %v348
        %1833 = vmatprep.subr.mxu0 0.0
        %1834 = vmatpush1.msra.mxu0 %v347
        %1835 = vmatprep.subr.mxu0 0.0
        %1836 = vmatpush1.msra.mxu0 %v346
        %1837 = vmatprep.subr.mxu0 0.0
        %1838 = vmatpush1.msra.mxu0 %v345
        %1839 = vmatprep.subr.mxu0 0.0
        %1840 = vmatpush1.msra.mxu0 %v344
        %1841 = vmatprep.subr.mxu0 0.0
        %1842 = vmatpush1.msra.mxu0 %v343
        %1843 = vmatprep.subr.mxu0 0.0
        %1844 = vmatpush1.msra.mxu0 %v342
        %1845 = vmatprep.subr.mxu0 0.0
        %1846 = vmatpush2.msra.mxu0 0.0
        %1847 = vmatprep.subr.mxu0 0.0
        %1848 = vmatpush2.msra.mxu0 0.0
        %1849 = vmatprep.subr.mxu0 0.0
        %1850 = vmatpush2.msra.mxu0 0.0
        %1851 = vmatprep.subr.mxu0 0.0
        %1852 = vmatpush2.msra.mxu0 0.0
        %1853 = vmatprep.subr.mxu0 0.0
        %1854 = vmatpush2.msra.mxu0 0.0
        %1855 = vmatprep.subr.mxu0 0.0
        %1856 = vmatpush2.msra.mxu0 0.0
        %1857 = vmatprep.subr.mxu0 0.0
        %1858 = vmatpush2.msra.mxu0 0.0
        %1859 = vmatprep.subr.mxu0 0.0
        %1860 = vmatpush2.msra.mxu0 0.0
        %1861 = vmatprep.subr.mxu0 0.0
        %1862 = vmatpush2.msra.mxu0 0.0
        %1863 = vmatprep.subr.mxu0 0.0
        %1864 = vmatpush2.msra.mxu0 0.0
        %1865 = vmatprep.subr.mxu0 0.0
        %1866 = vmatpush2.msra.mxu0 0.0
        %1867 = vmatprep.subr.mxu0 0.0
        %1868 = vmatpush2.msra.mxu0 0.0
        %1869 = vmatprep.subr.mxu0 0.0
        %1870 = vmatpush2.msra.mxu0 0.0
        %1871 = vmatprep.subr.mxu0 0.0
        %1872 = vmatpush2.msra.mxu0 0.0
        %1873 = vmatprep.subr.mxu0 0.0
        %1874 = vmatpush2.msra.mxu0 0.0
        %1875 = vmatprep.subr.mxu0 0.0
        %1876 = vmatpush2.msra.mxu0 0.0
        %1877 = vmatprep.mubr.f32.mxu0 0.0
        %1878 = vmatmul.mubr.f32.gmra.mxu0 %v1811
        %v1879 = vpop.f32.mrf.mxu0
        %v1880 = vadd.f32 0.0, %v1879
        %v1881 = vpop.f32.mrf.mxu0
        %1882 = vdwg.mxu0
        %v1885 = vunpack.c.l.s4 1966171168
        %v1886 = vunpack.c.0.s8 %v1885
        %v1887 = vlaneseq
        %v1888 = vshrl.u32 %v1887, 7
        %v1889 = vsub.s32 %v1886, %v1888
        %v1890 = vrot.slane %v1880, %v1889
        %v1891 = vcombine.high %v1890, %v1890
        %v1893 = vunpack.c.l.s4 1966171168
        %v1894 = vunpack.c.0.s8 %v1893
        %v1895 = vlaneseq
        %v1896 = vshrl.u32 %v1895, 7
        %v1897 = vsub.s32 %v1894, %v1896
        %v1898 = vrot.slane %v1890, %v1897
        %v1900 = vunpack.c.l.s4 1966171168
        %v1901 = vunpack.c.0.s8 %v1900
        %v1902 = vlaneseq
        %v1903 = vshrl.u32 %v1902, 7
        %v1904 = vsub.s32 %v1901, %v1903
        %v1905 = vrot.slane %v1891, %v1904
        %v1906 = vcombine.high %v1898, %v1898
        %v1907 = vcombine.high %v1905, %v1905
        %1912 = vst.msk [vmem:[%s230 + $0xc] sm:$0x1] %vm472, %v1898
        %1913 = vst.msk [vmem:[%s230 + $0x1c] sm:$0x1] %vm472, %v1905
        %1914 = vst.msk [vmem:[%s230 + $0x2c] sm:$0x1] %vm472, %v1906
        %1915 = vst.msk [vmem:[%s230 + $0x3c] sm:$0x1] %vm472, %v1907
        %1916 = vrot.lane.b32.xlu0 %v334, 48
        %v1917 = vpop.permute.xlu0 %1916
        %1919 = vrot.lane.b32.xlu0 %v1318, 64
        %v1920 = vpop.permute.xlu0 %1919
        %1922 = vrot.lane.b32.xlu0 %v340, 80
        %v1923 = vpop.permute.xlu0 %1922
        %1925 = vrot.lane.b32.xlu0 %v1326, 96
        %v1926 = vpop.permute.xlu0 %1925
        %v1928 = vsel %vm363, %v1917, %v1920
        %v1929 = vsel %vm365, %v1928, %v1923
        %v1930 = vsel %vm367, %v1929, %v1926
        %v1932 = vsel %vm369, %v1930, 0
        %1934 = vmatprep.subr.mxu0 0.0
        %1935 = vmatpush1.msra.mxu0 0.0
        %1936 = vmatprep.subr.mxu0 0.0
        %1937 = vmatpush1.msra.mxu0 0.0
        %1938 = vmatprep.subr.mxu0 0.0
        %1939 = vmatpush1.msra.mxu0 0.0
        %1940 = vmatprep.subr.mxu0 0.0
        %1941 = vmatpush1.msra.mxu0 0.0
        %1942 = vmatprep.subr.mxu0 0.0
        %1943 = vmatpush1.msra.mxu0 0.0
        %1944 = vmatprep.subr.mxu0 0.0
        %1945 = vmatpush1.msra.mxu0 0.0
        %1946 = vmatprep.subr.mxu0 0.0
        %1947 = vmatpush1.msra.mxu0 0.0
        %1948 = vmatprep.subr.mxu0 0.0
        %1949 = vmatpush1.msra.mxu0 0.0
        %1950 = vmatprep.subr.mxu0 0.0
        %1951 = vmatpush1.msra.mxu0 %v349
        %1952 = vmatprep.subr.mxu0 0.0
        %1953 = vmatpush1.msra.mxu0 %v348
        %1954 = vmatprep.subr.mxu0 0.0
        %1955 = vmatpush1.msra.mxu0 %v347
        %1956 = vmatprep.subr.mxu0 0.0
        %1957 = vmatpush1.msra.mxu0 %v346
        %1958 = vmatprep.subr.mxu0 0.0
        %1959 = vmatpush1.msra.mxu0 %v345
        %1960 = vmatprep.subr.mxu0 0.0
        %1961 = vmatpush1.msra.mxu0 %v344
        %1962 = vmatprep.subr.mxu0 0.0
        %1963 = vmatpush1.msra.mxu0 %v343
        %1964 = vmatprep.subr.mxu0 0.0
        %1965 = vmatpush1.msra.mxu0 %v342
        %1966 = vmatprep.subr.mxu0 0.0
        %1967 = vmatpush2.msra.mxu0 0.0
        %1968 = vmatprep.subr.mxu0 0.0
        %1969 = vmatpush2.msra.mxu0 0.0
        %1970 = vmatprep.subr.mxu0 0.0
        %1971 = vmatpush2.msra.mxu0 0.0
        %1972 = vmatprep.subr.mxu0 0.0
        %1973 = vmatpush2.msra.mxu0 0.0
        %1974 = vmatprep.subr.mxu0 0.0
        %1975 = vmatpush2.msra.mxu0 0.0
        %1976 = vmatprep.subr.mxu0 0.0
        %1977 = vmatpush2.msra.mxu0 0.0
        %1978 = vmatprep.subr.mxu0 0.0
        %1979 = vmatpush2.msra.mxu0 0.0
        %1980 = vmatprep.subr.mxu0 0.0
        %1981 = vmatpush2.msra.mxu0 0.0
        %1982 = vmatprep.subr.mxu0 0.0
        %1983 = vmatpush2.msra.mxu0 0.0
        %1984 = vmatprep.subr.mxu0 0.0
        %1985 = vmatpush2.msra.mxu0 0.0
        %1986 = vmatprep.subr.mxu0 0.0
        %1987 = vmatpush2.msra.mxu0 0.0
        %1988 = vmatprep.subr.mxu0 0.0
        %1989 = vmatpush2.msra.mxu0 0.0
        %1990 = vmatprep.subr.mxu0 0.0
        %1991 = vmatpush2.msra.mxu0 0.0
        %1992 = vmatprep.subr.mxu0 0.0
        %1993 = vmatpush2.msra.mxu0 0.0
        %1994 = vmatprep.subr.mxu0 0.0
        %1995 = vmatpush2.msra.mxu0 0.0
        %1996 = vmatprep.subr.mxu0 0.0
        %1997 = vmatpush2.msra.mxu0 0.0
        %1998 = vmatprep.mubr.f32.mxu0 0.0
        %1999 = vmatmul.mubr.f32.gmra.mxu0 %v1932
        %v2000 = vpop.f32.mrf.mxu0
        %v2001 = vadd.f32 0.0, %v2000
        %v2002 = vpop.f32.mrf.mxu0
        %2003 = vdwg.mxu0
        %v2006 = vunpack.c.l.s4 1966171168
        %v2007 = vunpack.c.0.s8 %v2006
        %v2008 = vlaneseq
        %v2009 = vshrl.u32 %v2008, 7
        %v2010 = vsub.s32 %v2007, %v2009
        %v2011 = vrot.slane %v2001, %v2010
        %v2012 = vcombine.high %v2011, %v2011
        %v2014 = vunpack.c.l.s4 1966171168
        %v2015 = vunpack.c.0.s8 %v2014
        %v2016 = vlaneseq
        %v2017 = vshrl.u32 %v2016, 7
        %v2018 = vsub.s32 %v2015, %v2017
        %v2019 = vrot.slane %v2011, %v2018
        %v2021 = vunpack.c.l.s4 1966171168
        %v2022 = vunpack.c.0.s8 %v2021
        %v2023 = vlaneseq
        %v2024 = vshrl.u32 %v2023, 7
        %v2025 = vsub.s32 %v2022, %v2024
        %v2026 = vrot.slane %v2012, %v2025
        %v2027 = vcombine.high %v2019, %v2019
        %v2028 = vcombine.high %v2026, %v2026
        %2033 = vst.msk [vmem:[%s230 + $0xd] sm:$0x1] %vm472, %v2019
        %2034 = vst.msk [vmem:[%s230 + $0x1d] sm:$0x1] %vm472, %v2026
        %2035 = vst.msk [vmem:[%s230 + $0x2d] sm:$0x1] %vm472, %v2027
        %2036 = vst.msk [vmem:[%s230 + $0x3d] sm:$0x1] %vm472, %v2028
        %2037 = vrot.lane.b32.xlu0 %v334, 32
        %v2038 = vpop.permute.xlu0 %2037
        %2040 = vrot.lane.b32.xlu0 %v1318, 48
        %v2041 = vpop.permute.xlu0 %2040
        %2043 = vrot.lane.b32.xlu0 %v340, 64
        %v2044 = vpop.permute.xlu0 %2043
        %2046 = vrot.lane.b32.xlu0 %v1326, 80
        %v2047 = vpop.permute.xlu0 %2046
        %v2049 = vsel %vm363, %v2038, %v2041
        %v2050 = vsel %vm365, %v2049, %v2044
        %v2051 = vsel %vm367, %v2050, %v2047
        %v2053 = vsel %vm369, %v2051, 0
        %2055 = vmatprep.subr.mxu0 0.0
        %2056 = vmatpush1.msra.mxu0 0.0
        %2057 = vmatprep.subr.mxu0 0.0
        %2058 = vmatpush1.msra.mxu0 0.0
        %2059 = vmatprep.subr.mxu0 0.0
        %2060 = vmatpush1.msra.mxu0 0.0
        %2061 = vmatprep.subr.mxu0 0.0
        %2062 = vmatpush1.msra.mxu0 0.0
        %2063 = vmatprep.subr.mxu0 0.0
        %2064 = vmatpush1.msra.mxu0 0.0
        %2065 = vmatprep.subr.mxu0 0.0
        %2066 = vmatpush1.msra.mxu0 0.0
        %2067 = vmatprep.subr.mxu0 0.0
        %2068 = vmatpush1.msra.mxu0 0.0
        %2069 = vmatprep.subr.mxu0 0.0
        %2070 = vmatpush1.msra.mxu0 0.0
        %2071 = vmatprep.subr.mxu0 0.0
        %2072 = vmatpush1.msra.mxu0 %v349
        %2073 = vmatprep.subr.mxu0 0.0
        %2074 = vmatpush1.msra.mxu0 %v348
        %2075 = vmatprep.subr.mxu0 0.0
        %2076 = vmatpush1.msra.mxu0 %v347
        %2077 = vmatprep.subr.mxu0 0.0
        %2078 = vmatpush1.msra.mxu0 %v346
        %2079 = vmatprep.subr.mxu0 0.0
        %2080 = vmatpush1.msra.mxu0 %v345
        %2081 = vmatprep.subr.mxu0 0.0
        %2082 = vmatpush1.msra.mxu0 %v344
        %2083 = vmatprep.subr.mxu0 0.0
        %2084 = vmatpush1.msra.mxu0 %v343
        %2085 = vmatprep.subr.mxu0 0.0
        %2086 = vmatpush1.msra.mxu0 %v342
        %2087 = vmatprep.subr.mxu0 0.0
        %2088 = vmatpush2.msra.mxu0 0.0
        %2089 = vmatprep.subr.mxu0 0.0
        %2090 = vmatpush2.msra.mxu0 0.0
        %2091 = vmatprep.subr.mxu0 0.0
        %2092 = vmatpush2.msra.mxu0 0.0
        %2093 = vmatprep.subr.mxu0 0.0
        %2094 = vmatpush2.msra.mxu0 0.0
        %2095 = vmatprep.subr.mxu0 0.0
        %2096 = vmatpush2.msra.mxu0 0.0
        %2097 = vmatprep.subr.mxu0 0.0
        %2098 = vmatpush2.msra.mxu0 0.0
        %2099 = vmatprep.subr.mxu0 0.0
        %2100 = vmatpush2.msra.mxu0 0.0
        %2101 = vmatprep.subr.mxu0 0.0
        %2102 = vmatpush2.msra.mxu0 0.0
        %2103 = vmatprep.subr.mxu0 0.0
        %2104 = vmatpush2.msra.mxu0 0.0
        %2105 = vmatprep.subr.mxu0 0.0
        %2106 = vmatpush2.msra.mxu0 0.0
        %2107 = vmatprep.subr.mxu0 0.0
        %2108 = vmatpush2.msra.mxu0 0.0
        %2109 = vmatprep.subr.mxu0 0.0
        %2110 = vmatpush2.msra.mxu0 0.0
        %2111 = vmatprep.subr.mxu0 0.0
        %2112 = vmatpush2.msra.mxu0 0.0
        %2113 = vmatprep.subr.mxu0 0.0
        %2114 = vmatpush2.msra.mxu0 0.0
        %2115 = vmatprep.subr.mxu0 0.0
        %2116 = vmatpush2.msra.mxu0 0.0
        %2117 = vmatprep.subr.mxu0 0.0
        %2118 = vmatpush2.msra.mxu0 0.0
        %2119 = vmatprep.mubr.f32.mxu0 0.0
        %2120 = vmatmul.mubr.f32.gmra.mxu0 %v2053
        %v2121 = vpop.f32.mrf.mxu0
        %v2122 = vadd.f32 0.0, %v2121
        %v2123 = vpop.f32.mrf.mxu0
        %2124 = vdwg.mxu0
        %v2127 = vunpack.c.l.s4 1966171168
        %v2128 = vunpack.c.0.s8 %v2127
        %v2129 = vlaneseq
        %v2130 = vshrl.u32 %v2129, 7
        %v2131 = vsub.s32 %v2128, %v2130
        %v2132 = vrot.slane %v2122, %v2131
        %v2133 = vcombine.high %v2132, %v2132
        %v2135 = vunpack.c.l.s4 1966171168
        %v2136 = vunpack.c.0.s8 %v2135
        %v2137 = vlaneseq
        %v2138 = vshrl.u32 %v2137, 7
        %v2139 = vsub.s32 %v2136, %v2138
        %v2140 = vrot.slane %v2132, %v2139
        %v2142 = vunpack.c.l.s4 1966171168
        %v2143 = vunpack.c.0.s8 %v2142
        %v2144 = vlaneseq
        %v2145 = vshrl.u32 %v2144, 7
        %v2146 = vsub.s32 %v2143, %v2145
        %v2147 = vrot.slane %v2133, %v2146
        %v2148 = vcombine.high %v2140, %v2140
        %v2149 = vcombine.high %v2147, %v2147
        %2154 = vst.msk [vmem:[%s230 + $0xe] sm:$0x1] %vm472, %v2140
        %2155 = vst.msk [vmem:[%s230 + $0x1e] sm:$0x1] %vm472, %v2147
        %2156 = vst.msk [vmem:[%s230 + $0x2e] sm:$0x1] %vm472, %v2148
        %2157 = vst.msk [vmem:[%s230 + $0x3e] sm:$0x1] %vm472, %v2149
        %2158 = vrot.lane.b32.xlu0 %v334, 16
        %v2159 = vpop.permute.xlu0 %2158
        %2161 = vrot.lane.b32.xlu0 %v1318, 32
        %v2162 = vpop.permute.xlu0 %2161
        %2164 = vrot.lane.b32.xlu0 %v340, 48
        %v2165 = vpop.permute.xlu0 %2164
        %2167 = vrot.lane.b32.xlu0 %v1326, 64
        %v2168 = vpop.permute.xlu0 %2167
        %v2170 = vsel %vm363, %v2159, %v2162
        %v2171 = vsel %vm365, %v2170, %v2165
        %v2172 = vsel %vm367, %v2171, %v2168
        %v2174 = vsel %vm369, %v2172, 0
        %2176 = vmatprep.subr.mxu0 0.0
        %2177 = vmatpush1.msra.mxu0 0.0
        %2178 = vmatprep.subr.mxu0 0.0
        %2179 = vmatpush1.msra.mxu0 0.0
        %2180 = vmatprep.subr.mxu0 0.0
        %2181 = vmatpush1.msra.mxu0 0.0
        %2182 = vmatprep.subr.mxu0 0.0
        %2183 = vmatpush1.msra.mxu0 0.0
        %2184 = vmatprep.subr.mxu0 0.0
        %2185 = vmatpush1.msra.mxu0 0.0
        %2186 = vmatprep.subr.mxu0 0.0
        %2187 = vmatpush1.msra.mxu0 0.0
        %2188 = vmatprep.subr.mxu0 0.0
        %2189 = vmatpush1.msra.mxu0 0.0
        %2190 = vmatprep.subr.mxu0 0.0
        %2191 = vmatpush1.msra.mxu0 0.0
        %2192 = vmatprep.subr.mxu0 0.0
        %2193 = vmatpush1.msra.mxu0 %v349
        %2194 = vmatprep.subr.mxu0 0.0
        %2195 = vmatpush1.msra.mxu0 %v348
        %2196 = vmatprep.subr.mxu0 0.0
        %2197 = vmatpush1.msra.mxu0 %v347
        %2198 = vmatprep.subr.mxu0 0.0
        %2199 = vmatpush1.msra.mxu0 %v346
        %2200 = vmatprep.subr.mxu0 0.0
        %2201 = vmatpush1.msra.mxu0 %v345
        %2202 = vmatprep.subr.mxu0 0.0
        %2203 = vmatpush1.msra.mxu0 %v344
        %2204 = vmatprep.subr.mxu0 0.0
        %2205 = vmatpush1.msra.mxu0 %v343
        %2206 = vmatprep.subr.mxu0 0.0
        %2207 = vmatpush1.msra.mxu0 %v342
        %2208 = vmatprep.subr.mxu0 0.0
        %2209 = vmatpush2.msra.mxu0 0.0
        %2210 = vmatprep.subr.mxu0 0.0
        %2211 = vmatpush2.msra.mxu0 0.0
        %2212 = vmatprep.subr.mxu0 0.0
        %2213 = vmatpush2.msra.mxu0 0.0
        %2214 = vmatprep.subr.mxu0 0.0
        %2215 = vmatpush2.msra.mxu0 0.0
        %2216 = vmatprep.subr.mxu0 0.0
        %2217 = vmatpush2.msra.mxu0 0.0
        %2218 = vmatprep.subr.mxu0 0.0
        %2219 = vmatpush2.msra.mxu0 0.0
        %2220 = vmatprep.subr.mxu0 0.0
        %2221 = vmatpush2.msra.mxu0 0.0
        %2222 = vmatprep.subr.mxu0 0.0
        %2223 = vmatpush2.msra.mxu0 0.0
        %2224 = vmatprep.subr.mxu0 0.0
        %2225 = vmatpush2.msra.mxu0 0.0
        %2226 = vmatprep.subr.mxu0 0.0
        %2227 = vmatpush2.msra.mxu0 0.0
        %2228 = vmatprep.subr.mxu0 0.0
        %2229 = vmatpush2.msra.mxu0 0.0
        %2230 = vmatprep.subr.mxu0 0.0
        %2231 = vmatpush2.msra.mxu0 0.0
        %2232 = vmatprep.subr.mxu0 0.0
        %2233 = vmatpush2.msra.mxu0 0.0
        %2234 = vmatprep.subr.mxu0 0.0
        %2235 = vmatpush2.msra.mxu0 0.0
        %2236 = vmatprep.subr.mxu0 0.0
        %2237 = vmatpush2.msra.mxu0 0.0
        %2238 = vmatprep.subr.mxu0 0.0
        %2239 = vmatpush2.msra.mxu0 0.0
        %2240 = vmatprep.mubr.f32.mxu0 0.0
        %2241 = vmatmul.mubr.f32.gmra.mxu0 %v2174
        %v2242 = vpop.f32.mrf.mxu0
        %v2243 = vadd.f32 0.0, %v2242
        %v2244 = vpop.f32.mrf.mxu0
        %2245 = vdwg.mxu0
        %v2248 = vunpack.c.l.s4 1966171168
        %v2249 = vunpack.c.0.s8 %v2248
        %v2250 = vlaneseq
        %v2251 = vshrl.u32 %v2250, 7
        %v2252 = vsub.s32 %v2249, %v2251
        %v2253 = vrot.slane %v2243, %v2252
        %v2254 = vcombine.high %v2253, %v2253
        %v2256 = vunpack.c.l.s4 1966171168
        %v2257 = vunpack.c.0.s8 %v2256
        %v2258 = vlaneseq
        %v2259 = vshrl.u32 %v2258, 7
        %v2260 = vsub.s32 %v2257, %v2259
        %v2261 = vrot.slane %v2253, %v2260
        %v2263 = vunpack.c.l.s4 1966171168
        %v2264 = vunpack.c.0.s8 %v2263
        %v2265 = vlaneseq
        %v2266 = vshrl.u32 %v2265, 7
        %v2267 = vsub.s32 %v2264, %v2266
        %v2268 = vrot.slane %v2254, %v2267
        %v2269 = vcombine.high %v2261, %v2261
        %v2270 = vcombine.high %v2268, %v2268
        %2275 = vst.msk [vmem:[%s230 + $0xf] sm:$0x1] %vm472, %v2261
        %2276 = vst.msk [vmem:[%s230 + $0x1f] sm:$0x1] %vm472, %v2268
        %2277 = vst.msk [vmem:[%s230 + $0x2f] sm:$0x1] %vm472, %v2269
        %2278 = vst.msk [vmem:[%s230 + $0x3f] sm:$0x1] %vm472, %v2270
        %s2279 = sand.u32 %s132, 1
        %s2280 = scalar_lea.sflag [#allocation4], %s2279
        %s2281 = sand.u32 %s132, 1
        %s2282 = smul.addr %s2281, 64
        %s2283 = scalar_lea.vmem [#allocation5], %s2282
        // Predicated region
        $region41: #{tpu_custom_call.1} parent=35 // pred_check
          %p2284 = pneg %p142
        $region42: #{tpu_custom_call.1} parent=35 // pred_check_branch
          %2286 = sbr.rel (%p2284) target = $region44
        $region43: #{tpu_custom_call.1} parent=35 // pred_region
          %s2287 = smul.u32 2, %s24
          %s2289 = ssub.s32 1024, 1024
          %2290 = vsyncadd %s2280, %s2289
          %s2291 = smul.addr %s23, 8
          %s2292 = sadd.s32 %s2287, %s2291
          %s2293 = smul.addr %s2292, 128
          %s2294 = scalar_lea.hbm %s4, %s2293
          %s2295 = sshll.u32 %s2283, 4
          %s2296 = int_to_ptr.vmem [resolvable:$true] %s2295
          %2301 = dma.vmem_to_hbm [thread:$0]  %s2296, 1024, %s2294, %s2280, 128, 128, 8
        $region44: #{tpu_custom_call.1} parent=35 // pred_fallthru
          _
      $region36: #{tpu_custom_call.1} parent=5 // pred_fallthru
        _
      %p2302 = scmp.le.s32.totalorder 2, %s14
      // Predicated region
      $region45: #{tpu_custom_call.1} parent=5 // pred_check
        %p2303 = pneg %p2302
      $region46: #{tpu_custom_call.1} parent=5 // pred_check_branch
        %2305 = sbr.rel (%p2303) target = $region48
      $region47: #{tpu_custom_call.1} parent=5 // pred_region
        %s2306 = ssub.s32 %s14, 2
        // Predicated region
        $region49: #{tpu_custom_call.1} parent=47 // pred_check
          %p2307 = pneg %p148
        $region50: #{tpu_custom_call.1} parent=47 // pred_check_branch
          %2309 = sbr.rel (%p2307) target = $region52
        $region51: #{tpu_custom_call.1} parent=47 // pred_region
          %s2310 = sand.u32 %s133, 1
          %s2311 = scalar_lea.sflag [#allocation4], %s2310
          %s2312 = sand.u32 %s133, 1
          %s2313 = smul.addr %s2312, 64
          %s2314 = scalar_lea.vmem [#allocation5], %s2313
          %2315 = dma.done %s2311, 1024
        $region52: #{tpu_custom_call.1} parent=47 // pred_fallthru
          _
      $region48: #{tpu_custom_call.1} parent=5 // pred_fallthru
        _
    $region6: #{tpu_custom_call.1} parent=1 // loop_footer
      %s18 = sadd.s32 1, %s14
    $region7: #{tpu_custom_call.1} parent=1 // loop_footer_branch
      %13 = sbr.rel target = $region3
    $region8: #{tpu_custom_call.1} parent=1 // loop_exit
      _
    %2316 = vsyncpa [#allocation3], 1
    %s2317 = scalar_lea.sflag [#allocation3], 1
    %2318 = vsyncpa %s2317, 1
    %2319 = vsyncpa [#allocation4], 1
    %s2320 = scalar_lea.sflag [#allocation4], 1
    %2321 = vsyncpa %s2320, 1

</llo_original>
